<compile_context>
chip_gen: v7x
topology: tpu7x:2x2x1
jax: 0.10.0
libtpu: 0.0.40
codegen_flags: <defaults>
</compile_context>

<pallas_src>
import functools

import jax
import jax.numpy as jnp
from jax.experimental import pallas as pl
from jax.experimental.pallas import tpu as pltpu

HIDDEN = 32
OBS_DIM = 64
# sorted(Action.edges) x sorted(arg.edges) -> Attack/Style, Attack/Target, Move/Direction
ACTION_SPACE = {"Attack": {"Style": 3, "Target": 8}, "Move": {"Direction": 4}}


def _sorted_arg_sizes():
    sizes = []
    for atn_key, atn in sorted(ACTION_SPACE.items()):
        for arg_key, n in sorted(atn.items()):
            sizes.append(((atn_key, arg_key), n))
    return sizes


_TOTAL_LOGITS = sum(n for _, n in _sorted_arg_sizes())
# lane-dense output width: [logits | value | zero pad] rounded up to a multiple of 128
_OUT_PAD = 128 * pl.cdiv(_TOTAL_LOGITS + 1, 128)

# ----- packed weight-slab layout (rows; all blocks are 128 lanes wide) ----------------------
_G = 4 * HIDDEN                      # 128 (lstm gate width)
_R_ENC = 0                           # enc_w   [OBS_DIM, 128]  (lanes >= HIDDEN are zero)
_R_WIH = _R_ENC + OBS_DIM            # w_ih    [128, 128]      (rows  >= HIDDEN are zero)
_R_WHH = _R_WIH + _G                 # w_hh    [HIDDEN, 128]
_R_OUT = _R_WHH + HIDDEN             # w_out   [HIDDEN, 128]   ([head_w | val_w | zero pad])
_R_BIAS = _R_OUT + HIDDEN            # biases  [8, 128]: row0 enc_b, row1 lstm_b, row2 out_b
_SLAB_ROWS = _R_BIAS + 8             # 264


# ---------------------------------------------------------------------------
# Fused Pallas kernel: encoder -> LSTM -> (logit heads + value head)
# ---------------------------------------------------------------------------

def _policy_kernel(x_ref, h0_ref, c0_ref, w_ref, out_ref, hseq_scr, *, B, T, H):
    W = out_ref.shape[1]                          # 128 lane-dense output width

    # Free static views into the packed weight slab.
    enc_w = w_ref[_R_ENC:_R_WIH, :]               # [OBS, 128]
    w_ih = w_ref[_R_WIH:_R_WHH, :]                # [128, 128]
    w_hh = w_ref[_R_WHH:_R_OUT, :]                # [H, 4H]
    w_out = w_ref[_R_OUT:_R_BIAS, :]              # [H, 128]  ([logits | value | 0])
    enc_b = w_ref[_R_BIAS + 0:_R_BIAS + 1, :]     # [1, 128]
    lstm_b = w_ref[_R_BIAS + 1:_R_BIAS + 2, :]    # [1, 128]  (= b_ih + b_hh)
    out_b = w_ref[_R_BIAS + 2:_R_BIAS + 3, :]     # [1, 128]

    # ---- encoder: feat = relu(x @ W_enc + b_enc), kept at full 128-lane width -- [B*T, 128]
    feat = jnp.maximum(
        jnp.dot(x_ref[...], enc_w, preferred_element_type=jnp.float32) + enc_b, 0.0)

    # ---- hoisted input projection for ALL timesteps (bias folded in once) ------ [B*T, 4H]
    gx = jnp.dot(feat, w_ih, preferred_element_type=jnp.float32) + lstm_b
    gx = gx.reshape(B, T, 4 * H)                  # batch-major rows (b*T + t)

    # ---- recurrence: only h @ W_hh + activations stay on the serial critical path ----------
    # TODO(synk): on v5e, staging the loop-invariant W_hh once via pltpu.matmul_push_rhs /
    # matmul_acc_lhs would avoid re-pushing the RHS through the MXU on each dependent step.
    h = h0_ref[...]
    c = c0_ref[...]
    for t in range(T):                            # T small & static -> fully unrolled
        gates = gx[:, t, :] + jnp.dot(h, w_hh, preferred_element_type=jnp.float32)
        sig = jax.nn.sigmoid(gates)               # one full-width [B,128] EUP chain
        tnh = jnp.tanh(gates)                     # one full-width [B,128] EUP push
        # torch.nn.LSTM gate order: input, forget, cell, output
        i_g = sig[:, 0 * H:1 * H]
        f_g = sig[:, 1 * H:2 * H]
        g_g = tnh[:, 2 * H:3 * H]
        o_g = sig[:, 3 * H:4 * H]
        c = f_g * c + i_g * g_g
        h = o_g * jnp.tanh(c)
        # strided sublane store -> batch-major row b*T + t; VMEM only, no relayout
        hseq_scr[pl.ds(t, B, stride=T), :] = h

    # ---- fused logit + value heads; single lane-dense store of the main output -------------
    out = jnp.dot(hseq_scr[...], w_out, preferred_element_type=jnp.float32) + out_b
    out_ref[0:B * T, :] = out

    # ---- pack (h_T, c_T) as extra rows of the same output slab (1 output DMA total) --------
    out_ref[B * T:, :] = jnp.zeros((2 * B, W), jnp.float32)
    out_ref[B * T:B * T + B, 0:H] = h
    out_ref[B * T + B:, 0:H] = c


# ---------------------------------------------------------------------------
# Parameters (deterministic synthetic init) + one-time packing + forward wrapper
# ---------------------------------------------------------------------------

def init_params(key):
    ks = jax.random.split(key, 5)
    scale = 0.1
    total = _TOTAL_LOGITS
    return {
        "enc_w": scale * jax.random.normal(ks[0], (OBS_DIM, HIDDEN), jnp.float32),
        "enc_b": jnp.zeros((HIDDEN,), jnp.float32),
        # TODO(synk): torch.nn.LSTM has two bias vectors (b_ih + b_hh); real checkpoint weights
        # must be summed into this single bias before packing.
        "lstm_wih": scale * jax.random.normal(ks[1], (HIDDEN, 4 * HIDDEN), jnp.float32),
        "lstm_whh": scale * jax.random.normal(ks[2], (HIDDEN, 4 * HIDDEN), jnp.float32),
        "lstm_b": jnp.zeros((4 * HIDDEN,), jnp.float32),
        # concatenation of the per-(action,arg) Linear(HIDDEN, n) heads along dim=1
        "head_w": scale * jax.random.normal(ks[3], (HIDDEN, total), jnp.float32),
        "head_b": jnp.zeros((total,), jnp.float32),
        # valueF = nn.Linear(HIDDEN, 1)
        "val_w": scale * jax.random.normal(ks[4], (HIDDEN, 1), jnp.float32),
        "val_b": jnp.zeros((1,), jnp.float32),
    }


def pack_params(params):
    """Pack all weights/biases ONCE into a single lane-dense f32 [_SLAB_ROWS, 128] slab."""
    total = _TOTAL_LOGITS
    w = jnp.zeros((_SLAB_ROWS, _OUT_PAD), jnp.float32)
    w = w.at[_R_ENC:_R_ENC + OBS_DIM, :HIDDEN].set(params["enc_w"])
    w = w.at[_R_WIH:_R_WIH + HIDDEN, :].set(params["lstm_wih"])   # rows >= HIDDEN stay zero
    w = w.at[_R_WHH:_R_WHH + HIDDEN, :].set(params["lstm_whh"])
    w = w.at[_R_OUT:_R_OUT + HIDDEN, :total].set(params["head_w"])
    w = w.at[_R_OUT:_R_OUT + HIDDEN, total:total + 1].set(params["val_w"])
    w = w.at[_R_BIAS + 0, :HIDDEN].set(params["enc_b"])
    w = w.at[_R_BIAS + 1, :].set(params["lstm_b"])
    w = w.at[_R_BIAS + 2, :total].set(params["head_b"])
    w = w.at[_R_BIAS + 2, total:total + 1].set(params["val_b"])
    return w


@jax.jit
def rllib_policy_forward(w_slab, obs, state, seq_lens):
    """Mirrors RLlibPolicy.forward: returns (cat(logits, dim=1), new_state, value)."""
    # TODO(synk): RLlib seq_lens-based padding mask is not applied (all sequences full length).
    del seq_lens
    B, T, _ = obs.shape
    h0, c0 = state
    total = _TOTAL_LOGITS

    x2d = obs.reshape(B * T, OBS_DIM)          # contiguous batch-major flatten (row = b*T + t)

    out = pl.pallas_call(
        functools.partial(_policy_kernel, B=B, T=T, H=HIDDEN),
        # single output slab: rows [0, B*T) = [logits | value | pad], then B rows h_T, B rows c_T
        out_shape=jax.ShapeDtypeStruct((B * T + 2 * B, _OUT_PAD), jnp.float32),
        scratch_shapes=[pltpu.VMEM((B * T, HIDDEN), jnp.float32)],  # h_seq, never leaves VMEM
        # TODO(synk): for large deployment batches on v7x, add a batch grid axis with
        # dimension_semantics=("parallel",) so both TensorCores get disjoint batch slices.
    )(x2d, h0, c0, w_slab)

    logits = out[:B * T, :total]               # torch.cat(logits, dim=1), sorted (action, arg)
    value = out[:B * T, total:total + 1]       # value_function()
    hT = out[B * T:B * T + B, :HIDDEN]
    cT = out[B * T + B:, :HIDDEN]
    return logits, [hT, cT], value


if __name__ == "__main__":
    key = jax.random.PRNGKey(0)
    pkey, okey = jax.random.split(key)
    params = init_params(pkey)
    w_slab = pack_params(params)               # packed once at parameter-prep time (not per call)

    B, T = 2, 8
    obs = jax.random.normal(okey, (B, T, OBS_DIM), jnp.float32)
    # get_initial_state(): zeros of shape [1, HIDDEN] per agent -> batched to [B, HIDDEN]
    state = [jnp.zeros((B, HIDDEN), jnp.float32),
             jnp.zeros((B, HIDDEN), jnp.float32)]
    seq_lens = jnp.full((B,), T, jnp.int32)

    logits, new_state, value = rllib_policy_forward(w_slab, obs, state, seq_lens)
    jax.block_until_ready((logits, new_state, value))

    total = sum(n for _, n in _sorted_arg_sizes())
    assert logits.shape == (B * T, total), logits.shape
    assert new_state[0].shape == (B, HIDDEN) and new_state[1].shape == (B, HIDDEN)
    assert value.shape == (B * T, 1), value.shape
    assert bool(jnp.all(jnp.isfinite(logits))) and bool(jnp.all(jnp.isfinite(value)))
    assert bool(jnp.all(jnp.isfinite(new_state[0]))) and bool(jnp.all(jnp.isfinite(new_state[1])))
    print("KERNEL_OK")
</pallas_src>

<mosaic_0001>
module attributes {stable_mosaic.version = 11 : i64} {
  func.func @_policy_kernel(%arg0: memref<16x64xf32, #tpu.memory_space<vmem>>, %arg1: memref<2x32xf32, #tpu.memory_space<vmem>>, %arg2: memref<2x32xf32, #tpu.memory_space<vmem>>, %arg3: memref<264x128xf32, #tpu.memory_space<vmem>>, %arg4: memref<20x128xf32, #tpu.memory_space<vmem>>, %arg5: memref<16x32xf32, #tpu.memory_space<vmem>>) attributes {dimension_semantics = [], scalar_prefetch = 0 : i64, scratch_operands = 1 : i64, tpu.core_type = #tpu.core_type<tc>} {
    %c0 = arith.constant 0 : index
    %c0_0 = arith.constant 0 : index
    %0 = vector.load %arg3[%c0, %c0_0] : memref<264x128xf32, #tpu.memory_space<vmem>>, vector<64x128xf32>
    %c64 = arith.constant 64 : index
    %c0_1 = arith.constant 0 : index
    %1 = vector.load %arg3[%c64, %c0_1] : memref<264x128xf32, #tpu.memory_space<vmem>>, vector<128x128xf32>
    %c192 = arith.constant 192 : index
    %c0_2 = arith.constant 0 : index
    %2 = vector.load %arg3[%c192, %c0_2] : memref<264x128xf32, #tpu.memory_space<vmem>>, vector<32x128xf32>
    %c224 = arith.constant 224 : index
    %c0_3 = arith.constant 0 : index
    %3 = vector.load %arg3[%c224, %c0_3] : memref<264x128xf32, #tpu.memory_space<vmem>>, vector<32x128xf32>
    %c256 = arith.constant 256 : index
    %c0_4 = arith.constant 0 : index
    %4 = vector.load %arg3[%c256, %c0_4] : memref<264x128xf32, #tpu.memory_space<vmem>>, vector<1x128xf32>
    %c257 = arith.constant 257 : index
    %c0_5 = arith.constant 0 : index
    %5 = vector.load %arg3[%c257, %c0_5] : memref<264x128xf32, #tpu.memory_space<vmem>>, vector<1x128xf32>
    %c258 = arith.constant 258 : index
    %c0_6 = arith.constant 0 : index
    %6 = vector.load %arg3[%c258, %c0_6] : memref<264x128xf32, #tpu.memory_space<vmem>>, vector<1x128xf32>
    %c0_7 = arith.constant 0 : index
    %c0_8 = arith.constant 0 : index
    %7 = vector.load %arg0[%c0_7, %c0_8] : memref<16x64xf32, #tpu.memory_space<vmem>>, vector<16x64xf32>
    %cst = arith.constant dense<0.000000e+00> : vector<16x128xf32>
    %8 = tpu.matmul %7, %0, %cst {dimension_numbers = #tpu.dot_dimension_numbers<[1], [0], [0], [1], [0, 0, 1, 1], [], []>} : vector<16x64xf32>, vector<64x128xf32>, vector<16x128xf32> -> vector<16x128xf32>
    %9 = vector.broadcast %4 : vector<1x128xf32> to vector<16x128xf32>
    %10 = arith.addf %8, %9 : vector<16x128xf32>
    %cst_9 = arith.constant 0.000000e+00 : f32
    %11 = vector.broadcast %cst_9 : f32 to vector<16x128xf32>
    %12 = arith.maximumf %10, %11 : vector<16x128xf32>
    %cst_10 = arith.constant dense<0.000000e+00> : vector<16x128xf32>
    %13 = tpu.matmul %12, %1, %cst_10 {dimension_numbers = #tpu.dot_dimension_numbers<[1], [0], [0], [1], [0, 0, 1, 1], [], []>} : vector<16x128xf32>, vector<128x128xf32>, vector<16x128xf32> -> vector<16x128xf32>
    %14 = vector.broadcast %5 : vector<1x128xf32> to vector<16x128xf32>
    %15 = arith.addf %13, %14 : vector<16x128xf32>
    %16 = vector.shape_cast %15 : vector<16x128xf32> to vector<2x8x128xf32>
    %c0_11 = arith.constant 0 : index
    %c0_12 = arith.constant 0 : index
    %17 = vector.load %arg1[%c0_11, %c0_12] : memref<2x32xf32, #tpu.memory_space<vmem>>, vector<2x32xf32>
    %c0_13 = arith.constant 0 : index
    %c0_14 = arith.constant 0 : index
    %18 = vector.load %arg2[%c0_13, %c0_14] : memref<2x32xf32, #tpu.memory_space<vmem>>, vector<2x32xf32>
    %19 = vector.extract_strided_slice %16 {offsets = [0, 0, 0], sizes = [2, 1, 128], strides = [1, 1, 1]} : vector<2x8x128xf32> to vector<2x1x128xf32>
    %20 = vector.shape_cast %19 : vector<2x1x128xf32> to vector<2x128xf32>
    %cst_15 = arith.constant dense<0.000000e+00> : vector<2x128xf32>
    %21 = tpu.matmul %17, %2, %cst_15 {dimension_numbers = #tpu.dot_dimension_numbers<[1], [0], [0], [1], [0, 0, 1, 1], [], []>} : vector<2x32xf32>, vector<32x128xf32>, vector<2x128xf32> -> vector<2x128xf32>
    %22 = arith.addf %20, %21 : vector<2x128xf32>
    %23 = arith.negf %22 : vector<2x128xf32>
    %24 = math.exp %23 : vector<2x128xf32>
    %cst_16 = arith.constant 1.000000e+00 : f32
    %25 = vector.broadcast %cst_16 : f32 to vector<2x128xf32>
    %26 = arith.addf %25, %24 : vector<2x128xf32>
    %27 = arith.divf %25, %26 : vector<2x128xf32>
    %28 = math.tanh %22 : vector<2x128xf32>
    %29 = vector.extract_strided_slice %27 {offsets = [0, 0], sizes = [2, 32], strides = [1, 1]} : vector<2x128xf32> to vector<2x32xf32>
    %30 = vector.extract_strided_slice %27 {offsets = [0, 32], sizes = [2, 32], strides = [1, 1]} : vector<2x128xf32> to vector<2x32xf32>
    %31 = vector.extract_strided_slice %28 {offsets = [0, 64], sizes = [2, 32], strides = [1, 1]} : vector<2x128xf32> to vector<2x32xf32>
    %32 = vector.extract_strided_slice %27 {offsets = [0, 96], sizes = [2, 32], strides = [1, 1]} : vector<2x128xf32> to vector<2x32xf32>
    %33 = arith.mulf %30, %18 : vector<2x32xf32>
    %34 = arith.mulf %29, %31 : vector<2x32xf32>
    %35 = arith.addf %33, %34 : vector<2x32xf32>
    %36 = math.tanh %35 : vector<2x32xf32>
    %37 = arith.mulf %32, %36 : vector<2x32xf32>
    %c0_17 = arith.constant 0 : index
    %c0_18 = arith.constant 0 : index
    %38 = tpu.strided_load %arg5[%c0_17, %c0_18] {strides = array<i32: 8, 1>} : memref<16x32xf32, #tpu.memory_space<vmem>>, vector<2x32xf32>
    tpu.strided_store %arg5[%c0_17, %c0_18], %37 {strides = array<i32: 8, 1>} : memref<16x32xf32, #tpu.memory_space<vmem>>, vector<2x32xf32>
    %39 = vector.extract_strided_slice %16 {offsets = [0, 1, 0], sizes = [2, 1, 128], strides = [1, 1, 1]} : vector<2x8x128xf32> to vector<2x1x128xf32>
    %40 = vector.shape_cast %39 : vector<2x1x128xf32> to vector<2x128xf32>
    %cst_19 = arith.constant dense<0.000000e+00> : vector<2x128xf32>
    %41 = tpu.matmul %37, %2, %cst_19 {dimension_numbers = #tpu.dot_dimension_numbers<[1], [0], [0], [1], [0, 0, 1, 1], [], []>} : vector<2x32xf32>, vector<32x128xf32>, vector<2x128xf32> -> vector<2x128xf32>
    %42 = arith.addf %40, %41 : vector<2x128xf32>
    %43 = arith.negf %42 : vector<2x128xf32>
    %44 = math.exp %43 : vector<2x128xf32>
    %cst_20 = arith.constant 1.000000e+00 : f32
    %45 = vector.broadcast %cst_20 : f32 to vector<2x128xf32>
    %46 = arith.addf %45, %44 : vector<2x128xf32>
    %47 = arith.divf %45, %46 : vector<2x128xf32>
    %48 = math.tanh %42 : vector<2x128xf32>
    %49 = vector.extract_strided_slice %47 {offsets = [0, 0], sizes = [2, 32], strides = [1, 1]} : vector<2x128xf32> to vector<2x32xf32>
    %50 = vector.extract_strided_slice %47 {offsets = [0, 32], sizes = [2, 32], strides = [1, 1]} : vector<2x128xf32> to vector<2x32xf32>
    %51 = vector.extract_strided_slice %48 {offsets = [0, 64], sizes = [2, 32], strides = [1, 1]} : vector<2x128xf32> to vector<2x32xf32>
    %52 = vector.extract_strided_slice %47 {offsets = [0, 96], sizes = [2, 32], strides = [1, 1]} : vector<2x128xf32> to vector<2x32xf32>
    %53 = arith.mulf %50, %35 : vector<2x32xf32>
    %54 = arith.mulf %49, %51 : vector<2x32xf32>
    %55 = arith.addf %53, %54 : vector<2x32xf32>
    %56 = math.tanh %55 : vector<2x32xf32>
    %57 = arith.mulf %52, %56 : vector<2x32xf32>
    %c1 = arith.constant 1 : index
    %c0_21 = arith.constant 0 : index
    %58 = tpu.strided_load %arg5[%c1, %c0_21] {strides = array<i32: 8, 1>} : memref<16x32xf32, #tpu.memory_space<vmem>>, vector<2x32xf32>
    tpu.strided_store %arg5[%c1, %c0_21], %57 {strides = array<i32: 8, 1>} : memref<16x32xf32, #tpu.memory_space<vmem>>, vector<2x32xf32>
    %59 = vector.extract_strided_slice %16 {offsets = [0, 2, 0], sizes = [2, 1, 128], strides = [1, 1, 1]} : vector<2x8x128xf32> to vector<2x1x128xf32>
    %60 = vector.shape_cast %59 : vector<2x1x128xf32> to vector<2x128xf32>
    %cst_22 = arith.constant dense<0.000000e+00> : vector<2x128xf32>
    %61 = tpu.matmul %57, %2, %cst_22 {dimension_numbers = #tpu.dot_dimension_numbers<[1], [0], [0], [1], [0, 0, 1, 1], [], []>} : vector<2x32xf32>, vector<32x128xf32>, vector<2x128xf32> -> vector<2x128xf32>
    %62 = arith.addf %60, %61 : vector<2x128xf32>
    %63 = arith.negf %62 : vector<2x128xf32>
    %64 = math.exp %63 : vector<2x128xf32>
    %cst_23 = arith.constant 1.000000e+00 : f32
    %65 = vector.broadcast %cst_23 : f32 to vector<2x128xf32>
    %66 = arith.addf %65, %64 : vector<2x128xf32>
    %67 = arith.divf %65, %66 : vector<2x128xf32>
    %68 = math.tanh %62 : vector<2x128xf32>
    %69 = vector.extract_strided_slice %67 {offsets = [0, 0], sizes = [2, 32], strides = [1, 1]} : vector<2x128xf32> to vector<2x32xf32>
    %70 = vector.extract_strided_slice %67 {offsets = [0, 32], sizes = [2, 32], strides = [1, 1]} : vector<2x128xf32> to vector<2x32xf32>
    %71 = vector.extract_strided_slice %68 {offsets = [0, 64], sizes = [2, 32], strides = [1, 1]} : vector<2x128xf32> to vector<2x32xf32>
    %72 = vector.extract_strided_slice %67 {offsets = [0, 96], sizes = [2, 32], strides = [1, 1]} : vector<2x128xf32> to vector<2x32xf32>
    %73 = arith.mulf %70, %55 : vector<2x32xf32>
    %74 = arith.mulf %69, %71 : vector<2x32xf32>
    %75 = arith.addf %73, %74 : vector<2x32xf32>
    %76 = math.tanh %75 : vector<2x32xf32>
    %77 = arith.mulf %72, %76 : vector<2x32xf32>
    %c2 = arith.constant 2 : index
    %c0_24 = arith.constant 0 : index
    %78 = tpu.strided_load %arg5[%c2, %c0_24] {strides = array<i32: 8, 1>} : memref<16x32xf32, #tpu.memory_space<vmem>>, vector<2x32xf32>
    tpu.strided_store %arg5[%c2, %c0_24], %77 {strides = array<i32: 8, 1>} : memref<16x32xf32, #tpu.memory_space<vmem>>, vector<2x32xf32>
    %79 = vector.extract_strided_slice %16 {offsets = [0, 3, 0], sizes = [2, 1, 128], strides = [1, 1, 1]} : vector<2x8x128xf32> to vector<2x1x128xf32>
    %80 = vector.shape_cast %79 : vector<2x1x128xf32> to vector<2x128xf32>
    %cst_25 = arith.constant dense<0.000000e+00> : vector<2x128xf32>
    %81 = tpu.matmul %77, %2, %cst_25 {dimension_numbers = #tpu.dot_dimension_numbers<[1], [0], [0], [1], [0, 0, 1, 1], [], []>} : vector<2x32xf32>, vector<32x128xf32>, vector<2x128xf32> -> vector<2x128xf32>
    %82 = arith.addf %80, %81 : vector<2x128xf32>
    %83 = arith.negf %82 : vector<2x128xf32>
    %84 = math.exp %83 : vector<2x128xf32>
    %cst_26 = arith.constant 1.000000e+00 : f32
    %85 = vector.broadcast %cst_26 : f32 to vector<2x128xf32>
    %86 = arith.addf %85, %84 : vector<2x128xf32>
    %87 = arith.divf %85, %86 : vector<2x128xf32>
    %88 = math.tanh %82 : vector<2x128xf32>
    %89 = vector.extract_strided_slice %87 {offsets = [0, 0], sizes = [2, 32], strides = [1, 1]} : vector<2x128xf32> to vector<2x32xf32>
    %90 = vector.extract_strided_slice %87 {offsets = [0, 32], sizes = [2, 32], strides = [1, 1]} : vector<2x128xf32> to vector<2x32xf32>
    %91 = vector.extract_strided_slice %88 {offsets = [0, 64], sizes = [2, 32], strides = [1, 1]} : vector<2x128xf32> to vector<2x32xf32>
    %92 = vector.extract_strided_slice %87 {offsets = [0, 96], sizes = [2, 32], strides = [1, 1]} : vector<2x128xf32> to vector<2x32xf32>
    %93 = arith.mulf %90, %75 : vector<2x32xf32>
    %94 = arith.mulf %89, %91 : vector<2x32xf32>
    %95 = arith.addf %93, %94 : vector<2x32xf32>
    %96 = math.tanh %95 : vector<2x32xf32>
    %97 = arith.mulf %92, %96 : vector<2x32xf32>
    %c3 = arith.constant 3 : index
    %c0_27 = arith.constant 0 : index
    %98 = tpu.strided_load %arg5[%c3, %c0_27] {strides = array<i32: 8, 1>} : memref<16x32xf32, #tpu.memory_space<vmem>>, vector<2x32xf32>
    tpu.strided_store %arg5[%c3, %c0_27], %97 {strides = array<i32: 8, 1>} : memref<16x32xf32, #tpu.memory_space<vmem>>, vector<2x32xf32>
    %99 = vector.extract_strided_slice %16 {offsets = [0, 4, 0], sizes = [2, 1, 128], strides = [1, 1, 1]} : vector<2x8x128xf32> to vector<2x1x128xf32>
    %100 = vector.shape_cast %99 : vector<2x1x128xf32> to vector<2x128xf32>
    %cst_28 = arith.constant dense<0.000000e+00> : vector<2x128xf32>
    %101 = tpu.matmul %97, %2, %cst_28 {dimension_numbers = #tpu.dot_dimension_numbers<[1], [0], [0], [1], [0, 0, 1, 1], [], []>} : vector<2x32xf32>, vector<32x128xf32>, vector<2x128xf32> -> vector<2x128xf32>
    %102 = arith.addf %100, %101 : vector<2x128xf32>
    %103 = arith.negf %102 : vector<2x128xf32>
    %104 = math.exp %103 : vector<2x128xf32>
    %cst_29 = arith.constant 1.000000e+00 : f32
    %105 = vector.broadcast %cst_29 : f32 to vector<2x128xf32>
    %106 = arith.addf %105, %104 : vector<2x128xf32>
    %107 = arith.divf %105, %106 : vector<2x128xf32>
    %108 = math.tanh %102 : vector<2x128xf32>
    %109 = vector.extract_strided_slice %107 {offsets = [0, 0], sizes = [2, 32], strides = [1, 1]} : vector<2x128xf32> to vector<2x32xf32>
    %110 = vector.extract_strided_slice %107 {offsets = [0, 32], sizes = [2, 32], strides = [1, 1]} : vector<2x128xf32> to vector<2x32xf32>
    %111 = vector.extract_strided_slice %108 {offsets = [0, 64], sizes = [2, 32], strides = [1, 1]} : vector<2x128xf32> to vector<2x32xf32>
    %112 = vector.extract_strided_slice %107 {offsets = [0, 96], sizes = [2, 32], strides = [1, 1]} : vector<2x128xf32> to vector<2x32xf32>
    %113 = arith.mulf %110, %95 : vector<2x32xf32>
    %114 = arith.mulf %109, %111 : vector<2x32xf32>
    %115 = arith.addf %113, %114 : vector<2x32xf32>
    %116 = math.tanh %115 : vector<2x32xf32>
    %117 = arith.mulf %112, %116 : vector<2x32xf32>
    %c4 = arith.constant 4 : index
    %c0_30 = arith.constant 0 : index
    %118 = tpu.strided_load %arg5[%c4, %c0_30] {strides = array<i32: 8, 1>} : memref<16x32xf32, #tpu.memory_space<vmem>>, vector<2x32xf32>
    tpu.strided_store %arg5[%c4, %c0_30], %117 {strides = array<i32: 8, 1>} : memref<16x32xf32, #tpu.memory_space<vmem>>, vector<2x32xf32>
    %119 = vector.extract_strided_slice %16 {offsets = [0, 5, 0], sizes = [2, 1, 128], strides = [1, 1, 1]} : vector<2x8x128xf32> to vector<2x1x128xf32>
    %120 = vector.shape_cast %119 : vector<2x1x128xf32> to vector<2x128xf32>
    %cst_31 = arith.constant dense<0.000000e+00> : vector<2x128xf32>
    %121 = tpu.matmul %117, %2, %cst_31 {dimension_numbers = #tpu.dot_dimension_numbers<[1], [0], [0], [1], [0, 0, 1, 1], [], []>} : vector<2x32xf32>, vector<32x128xf32>, vector<2x128xf32> -> vector<2x128xf32>
    %122 = arith.addf %120, %121 : vector<2x128xf32>
    %123 = arith.negf %122 : vector<2x128xf32>
    %124 = math.exp %123 : vector<2x128xf32>
    %cst_32 = arith.constant 1.000000e+00 : f32
    %125 = vector.broadcast %cst_32 : f32 to vector<2x128xf32>
    %126 = arith.addf %125, %124 : vector<2x128xf32>
    %127 = arith.divf %125, %126 : vector<2x128xf32>
    %128 = math.tanh %122 : vector<2x128xf32>
    %129 = vector.extract_strided_slice %127 {offsets = [0, 0], sizes = [2, 32], strides = [1, 1]} : vector<2x128xf32> to vector<2x32xf32>
    %130 = vector.extract_strided_slice %127 {offsets = [0, 32], sizes = [2, 32], strides = [1, 1]} : vector<2x128xf32> to vector<2x32xf32>
    %131 = vector.extract_strided_slice %128 {offsets = [0, 64], sizes = [2, 32], strides = [1, 1]} : vector<2x128xf32> to vector<2x32xf32>
    %132 = vector.extract_strided_slice %127 {offsets = [0, 96], sizes = [2, 32], strides = [1, 1]} : vector<2x128xf32> to vector<2x32xf32>
    %133 = arith.mulf %130, %115 : vector<2x32xf32>
    %134 = arith.mulf %129, %131 : vector<2x32xf32>
    %135 = arith.addf %133, %134 : vector<2x32xf32>
    %136 = math.tanh %135 : vector<2x32xf32>
    %137 = arith.mulf %132, %136 : vector<2x32xf32>
    %c5 = arith.constant 5 : index
    %c0_33 = arith.constant 0 : index
    %138 = tpu.strided_load %arg5[%c5, %c0_33] {strides = array<i32: 8, 1>} : memref<16x32xf32, #tpu.memory_space<vmem>>, vector<2x32xf32>
    tpu.strided_store %arg5[%c5, %c0_33], %137 {strides = array<i32: 8, 1>} : memref<16x32xf32, #tpu.memory_space<vmem>>, vector<2x32xf32>
    %139 = vector.extract_strided_slice %16 {offsets = [0, 6, 0], sizes = [2, 1, 128], strides = [1, 1, 1]} : vector<2x8x128xf32> to vector<2x1x128xf32>
    %140 = vector.shape_cast %139 : vector<2x1x128xf32> to vector<2x128xf32>
    %cst_34 = arith.constant dense<0.000000e+00> : vector<2x128xf32>
    %141 = tpu.matmul %137, %2, %cst_34 {dimension_numbers = #tpu.dot_dimension_numbers<[1], [0], [0], [1], [0, 0, 1, 1], [], []>} : vector<2x32xf32>, vector<32x128xf32>, vector<2x128xf32> -> vector<2x128xf32>
    %142 = arith.addf %140, %141 : vector<2x128xf32>
    %143 = arith.negf %142 : vector<2x128xf32>
    %144 = math.exp %143 : vector<2x128xf32>
    %cst_35 = arith.constant 1.000000e+00 : f32
    %145 = vector.broadcast %cst_35 : f32 to vector<2x128xf32>
    %146 = arith.addf %145, %144 : vector<2x128xf32>
    %147 = arith.divf %145, %146 : vector<2x128xf32>
    %148 = math.tanh %142 : vector<2x128xf32>
    %149 = vector.extract_strided_slice %147 {offsets = [0, 0], sizes = [2, 32], strides = [1, 1]} : vector<2x128xf32> to vector<2x32xf32>
    %150 = vector.extract_strided_slice %147 {offsets = [0, 32], sizes = [2, 32], strides = [1, 1]} : vector<2x128xf32> to vector<2x32xf32>
    %151 = vector.extract_strided_slice %148 {offsets = [0, 64], sizes = [2, 32], strides = [1, 1]} : vector<2x128xf32> to vector<2x32xf32>
    %152 = vector.extract_strided_slice %147 {offsets = [0, 96], sizes = [2, 32], strides = [1, 1]} : vector<2x128xf32> to vector<2x32xf32>
    %153 = arith.mulf %150, %135 : vector<2x32xf32>
    %154 = arith.mulf %149, %151 : vector<2x32xf32>
    %155 = arith.addf %153, %154 : vector<2x32xf32>
    %156 = math.tanh %155 : vector<2x32xf32>
    %157 = arith.mulf %152, %156 : vector<2x32xf32>
    %c6 = arith.constant 6 : index
    %c0_36 = arith.constant 0 : index
    %158 = tpu.strided_load %arg5[%c6, %c0_36] {strides = array<i32: 8, 1>} : memref<16x32xf32, #tpu.memory_space<vmem>>, vector<2x32xf32>
    tpu.strided_store %arg5[%c6, %c0_36], %157 {strides = array<i32: 8, 1>} : memref<16x32xf32, #tpu.memory_space<vmem>>, vector<2x32xf32>
    %159 = vector.extract_strided_slice %16 {offsets = [0, 7, 0], sizes = [2, 1, 128], strides = [1, 1, 1]} : vector<2x8x128xf32> to vector<2x1x128xf32>
    %160 = vector.shape_cast %159 : vector<2x1x128xf32> to vector<2x128xf32>
    %cst_37 = arith.constant dense<0.000000e+00> : vector<2x128xf32>
    %161 = tpu.matmul %157, %2, %cst_37 {dimension_numbers = #tpu.dot_dimension_numbers<[1], [0], [0], [1], [0, 0, 1, 1], [], []>} : vector<2x32xf32>, vector<32x128xf32>, vector<2x128xf32> -> vector<2x128xf32>
    %162 = arith.addf %160, %161 : vector<2x128xf32>
    %163 = arith.negf %162 : vector<2x128xf32>
    %164 = math.exp %163 : vector<2x128xf32>
    %cst_38 = arith.constant 1.000000e+00 : f32
    %165 = vector.broadcast %cst_38 : f32 to vector<2x128xf32>
    %166 = arith.addf %165, %164 : vector<2x128xf32>
    %167 = arith.divf %165, %166 : vector<2x128xf32>
    %168 = math.tanh %162 : vector<2x128xf32>
    %169 = vector.extract_strided_slice %167 {offsets = [0, 0], sizes = [2, 32], strides = [1, 1]} : vector<2x128xf32> to vector<2x32xf32>
    %170 = vector.extract_strided_slice %167 {offsets = [0, 32], sizes = [2, 32], strides = [1, 1]} : vector<2x128xf32> to vector<2x32xf32>
    %171 = vector.extract_strided_slice %168 {offsets = [0, 64], sizes = [2, 32], strides = [1, 1]} : vector<2x128xf32> to vector<2x32xf32>
    %172 = vector.extract_strided_slice %167 {offsets = [0, 96], sizes = [2, 32], strides = [1, 1]} : vector<2x128xf32> to vector<2x32xf32>
    %173 = arith.mulf %170, %155 : vector<2x32xf32>
    %174 = arith.mulf %169, %171 : vector<2x32xf32>
    %175 = arith.addf %173, %174 : vector<2x32xf32>
    %176 = math.tanh %175 : vector<2x32xf32>
    %177 = arith.mulf %172, %176 : vector<2x32xf32>
    %c7 = arith.constant 7 : index
    %c0_39 = arith.constant 0 : index
    %178 = tpu.strided_load %arg5[%c7, %c0_39] {strides = array<i32: 8, 1>} : memref<16x32xf32, #tpu.memory_space<vmem>>, vector<2x32xf32>
    tpu.strided_store %arg5[%c7, %c0_39], %177 {strides = array<i32: 8, 1>} : memref<16x32xf32, #tpu.memory_space<vmem>>, vector<2x32xf32>
    %c0_40 = arith.constant 0 : index
    %c0_41 = arith.constant 0 : index
    %179 = vector.load %arg5[%c0_40, %c0_41] : memref<16x32xf32, #tpu.memory_space<vmem>>, vector<16x32xf32>
    %cst_42 = arith.constant dense<0.000000e+00> : vector<16x128xf32>
    %180 = tpu.matmul %179, %3, %cst_42 {dimension_numbers = #tpu.dot_dimension_numbers<[1], [0], [0], [1], [0, 0, 1, 1], [], []>} : vector<16x32xf32>, vector<32x128xf32>, vector<16x128xf32> -> vector<16x128xf32>
    %181 = vector.broadcast %6 : vector<1x128xf32> to vector<16x128xf32>
    %182 = arith.addf %180, %181 : vector<16x128xf32>
    %c0_43 = arith.constant 0 : index
    %c0_44 = arith.constant 0 : index
    %183 = vector.load %arg4[%c0_43, %c0_44] : memref<20x128xf32, #tpu.memory_space<vmem>>, vector<16x128xf32>
    tpu.vector_store %arg4[%c0_43, %c0_44], %182 {strides = array<i32>} : memref<20x128xf32, #tpu.memory_space<vmem>>, vector<16x128xf32>,
    %cst_45 = arith.constant 0.000000e+00 : f32
    %184 = vector.broadcast %cst_45 : f32 to vector<4x128xf32>
    %c16 = arith.constant 16 : index
    %c0_46 = arith.constant 0 : index
    %185 = vector.load %arg4[%c16, %c0_46] : memref<20x128xf32, #tpu.memory_space<vmem>>, vector<4x128xf32>
    tpu.vector_store %arg4[%c16, %c0_46], %184 {strides = array<i32>} : memref<20x128xf32, #tpu.memory_space<vmem>>, vector<4x128xf32>,
    %c16_47 = arith.constant 16 : index
    %c0_48 = arith.constant 0 : index
    %186 = vector.load %arg4[%c16_47, %c0_48] : memref<20x128xf32, #tpu.memory_space<vmem>>, vector<2x32xf32>
    tpu.vector_store %arg4[%c16_47, %c0_48], %177 {strides = array<i32>} : memref<20x128xf32, #tpu.memory_space<vmem>>, vector<2x32xf32>,
    %c18 = arith.constant 18 : index
    %c0_49 = arith.constant 0 : index
    %187 = vector.load %arg4[%c18, %c0_49] : memref<20x128xf32, #tpu.memory_space<vmem>>, vector<2x32xf32>
    tpu.vector_store %arg4[%c18, %c0_49], %175 {strides = array<i32>} : memref<20x128xf32, #tpu.memory_space<vmem>>, vector<2x32xf32>,
    return
  }
}

</mosaic_0001>

<llo_original>
// kernel: rllib_policy_forward.1
$region0: #{rllib_policy_forward.1}
  #allocation0 [shape = 'u32[]', space=smem, size = 0x4, offset = 0x4, fixed_abs, tag = 'smem constant byte address 0x4 - core index']
  #allocation1 [shape = 'u32[144,128]{1,0:T(1,128)}', space=vmem, size = 0x12000, scoped, tag = 'internal scratch']
  #allocation2 [shape = 'f32[16,32]{1,0:T(8,128)}', space=vmem, size = 0x2000, scoped, tag = 'scratch operand']
  %s0 = inlined_call_operand.hbm [shape: f32[16,64], index: 0, kind: input, shape index: {}]
  %s1 = inlined_call_operand.vmem [shape: f32[2,32], index: 1, kind: input, shape index: {}]
  %s2 = inlined_call_operand.vmem [shape: f32[2,32], index: 2, kind: input, shape index: {}]
  %s3 = inlined_call_operand.hbm [shape: f32[264,128], index: 3, kind: input, shape index: {}]
  %s4 = inlined_call_operand.vmem [shape: f32[20,128], index: 4, kind: output, shape index: {}]
  %s5 = sld [smem:[#allocation0]]
  $region34: #{rllib_policy_forward.1} parent=0
    _
  %s7 = ssub.s32 1, %s5
  %s8 = scalar_select 0, %s7, %s5
  $region1: #{rllib_policy_forward.1} parent=0
    #allocation3 [shape = 'u8[8192]{0}', space=vmem, size = 0x2000, scoped, tag = 'input window, operand 0, single buffered']
    #allocation4 [shape = 's32[1]{0}', space=sflag, size = 0x4, scoped, tag = 'scoped memory for rllib_policy_forward.1']
    #allocation5 [shape = 'u8[135168]{0}', space=vmem, size = 0x21000, scoped, tag = 'input window, operand 3, single buffered']
    #allocation6 [shape = 's32[1]{0}', space=sflag, size = 0x4, scoped, tag = 'scoped memory for rllib_policy_forward.1']
    %9 = vsyncpa [#allocation4], 0
    %10 = vsyncpa [#allocation6], 0
    // Predicated region
    $region2: #{rllib_policy_forward.1} parent=1 // pred_check
      _
    $region3: #{rllib_policy_forward.1} parent=1 // pred_check_branch
      %12 = sbr.rel (0) target = $region5
    $region4: #{rllib_policy_forward.1} parent=1 // pred_region
      %s14 = ssub.s32 256, 256
      %15 = vsyncadd [#allocation4], %s14
      %s16 = sshll.u32 [#allocation3], 4
      %s17 = int_to_ptr.vmem [resolvable:$true] %s16
      %22 = dma.hbm_to_vmem [thread:$0]  %s0, 256, %s17, [#allocation4], 128, 128, 8
    $region5: #{rllib_policy_forward.1} parent=1 // pred_fallthru
      _
    // Predicated region
    $region6: #{rllib_policy_forward.1} parent=1 // pred_check
      _
    $region7: #{rllib_policy_forward.1} parent=1 // pred_check_branch
      %24 = sbr.rel (0) target = $region9
    $region8: #{rllib_policy_forward.1} parent=1 // pred_region
      _
    $region9: #{rllib_policy_forward.1} parent=1 // pred_fallthru
      _
    // Predicated region
    $region10: #{rllib_policy_forward.1} parent=1 // pred_check
      _
    $region11: #{rllib_policy_forward.1} parent=1 // pred_check_branch
      %26 = sbr.rel (0) target = $region13
    $region12: #{rllib_policy_forward.1} parent=1 // pred_region
      _
    $region13: #{rllib_policy_forward.1} parent=1 // pred_fallthru
      _
    // Predicated region
    $region14: #{rllib_policy_forward.1} parent=1 // pred_check
      _
    $region15: #{rllib_policy_forward.1} parent=1 // pred_check_branch
      %28 = sbr.rel (0) target = $region17
    $region16: #{rllib_policy_forward.1} parent=1 // pred_region
      %s30 = ssub.s32 4224, 4224
      %31 = vsyncadd [#allocation6], %s30
      %s32 = sshll.u32 [#allocation5], 4
      %s33 = int_to_ptr.vmem [resolvable:$true] %s32
      %38 = dma.hbm_to_vmem [thread:$0]  %s3, 4224, %s33, [#allocation6], 128, 128, 8
    $region17: #{rllib_policy_forward.1} parent=1 // pred_fallthru
      _
    // Predicated region
    $region18: #{rllib_policy_forward.1} parent=1 // pred_check
      _
    $region19: #{rllib_policy_forward.1} parent=1 // pred_check_branch
      %40 = sbr.rel (0) target = $region21
    $region20: #{rllib_policy_forward.1} parent=1 // pred_region
      %41 = dma.done [#allocation4], 256
    $region21: #{rllib_policy_forward.1} parent=1 // pred_fallthru
      _
    // Predicated region
    $region22: #{rllib_policy_forward.1} parent=1 // pred_check
      _
    $region23: #{rllib_policy_forward.1} parent=1 // pred_check_branch
      %43 = sbr.rel (0) target = $region25
    $region24: #{rllib_policy_forward.1} parent=1 // pred_region
      %44 = dma.done [#allocation6], 4224
    $region25: #{rllib_policy_forward.1} parent=1 // pred_fallthru
      _
    %v45 = vld [vmem:[#allocation5] sm:$0xff]
    %v46 = vld [vmem:[#allocation5 + $0x8] sm:$0xff]
    %v47 = vld [vmem:[#allocation5 + $0x10] sm:$0xff]
    %v48 = vld [vmem:[#allocation5 + $0x18] sm:$0xff]
    %v49 = vld [vmem:[#allocation5 + $0x20] sm:$0xff]
    %v50 = vld [vmem:[#allocation5 + $0x28] sm:$0xff]
    %v51 = vld [vmem:[#allocation5 + $0x30] sm:$0xff]
    %v52 = vld [vmem:[#allocation5 + $0x38] sm:$0xff]
    %v53 = vld [vmem:[#allocation5 + $0x40] sm:$0xff]
    %v54 = vld [vmem:[#allocation5 + $0x48] sm:$0xff]
    %v55 = vld [vmem:[#allocation5 + $0x50] sm:$0xff]
    %v56 = vld [vmem:[#allocation5 + $0x58] sm:$0xff]
    %v57 = vld [vmem:[#allocation5 + $0x60] sm:$0xff]
    %v58 = vld [vmem:[#allocation5 + $0x68] sm:$0xff]
    %v59 = vld [vmem:[#allocation5 + $0x70] sm:$0xff]
    %v60 = vld [vmem:[#allocation5 + $0x78] sm:$0xff]
    %v61 = vld [vmem:[#allocation5 + $0x80] sm:$0xff]
    %v62 = vld [vmem:[#allocation5 + $0x88] sm:$0xff]
    %v63 = vld [vmem:[#allocation5 + $0x90] sm:$0xff]
    %v64 = vld [vmem:[#allocation5 + $0x98] sm:$0xff]
    %v65 = vld [vmem:[#allocation5 + $0xa0] sm:$0xff]
    %v66 = vld [vmem:[#allocation5 + $0xa8] sm:$0xff]
    %v67 = vld [vmem:[#allocation5 + $0xb0] sm:$0xff]
    %v68 = vld [vmem:[#allocation5 + $0xb8] sm:$0xff]
    %v69 = vld [vmem:[#allocation5 + $0xc0] sm:$0xff]
    %v70 = vld [vmem:[#allocation5 + $0xc8] sm:$0xff]
    %v71 = vld [vmem:[#allocation5 + $0xd0] sm:$0xff]
    %v72 = vld [vmem:[#allocation5 + $0xd8] sm:$0xff]
    %v73 = vld [vmem:[#allocation5 + $0xe0] sm:$0xff]
    %v74 = vld [vmem:[#allocation5 + $0xe8] sm:$0xff]
    %v75 = vld [vmem:[#allocation5 + $0xf0] sm:$0xff]
    %v76 = vld [vmem:[#allocation5 + $0xf8] sm:$0xff]
    %v77 = vld [vmem:[#allocation5 + $0x100] sm:$0x1]
    %v78 = vld [vmem:[#allocation5 + $0x101] sm:$0x1]
    %v79 = vld [vmem:[#allocation5 + $0x102] sm:$0x1]
    %v80 = vld [vmem:[#allocation3] sm:$0xff]
    %v81 = vld [vmem:[#allocation3 + $0x8] sm:$0xff]
    %v82 = vlaneseq
    %v83 = vshrl.u32 %v82, 7
    %v84 = vsub.s32 0, %v83
    %v85 = vrot.slane %v77, %v84
    %vm86 = vcmask 523264
    %v88 = vsel %vm86, %v80, 0
    %v91 = vsel %vm86, %v81, 0
    %93 = vmatprep.subr.mxu0 0.0
    %94 = vmatpush1.msra.mxu0 %v45
    %95 = vmatprep.subr.mxu0 0.0
    %96 = vmatpush1.msra.mxu0 %v46
    %97 = vmatprep.subr.mxu0 0.0
    %98 = vmatpush1.msra.mxu0 %v47
    %99 = vmatprep.subr.mxu0 0.0
    %100 = vmatpush1.msra.mxu0 %v48
    %101 = vmatprep.subr.mxu0 0.0
    %102 = vmatpush1.msra.mxu0 %v49
    %103 = vmatprep.subr.mxu0 0.0
    %104 = vmatpush1.msra.mxu0 %v50
    %105 = vmatprep.subr.mxu0 0.0
    %106 = vmatpush1.msra.mxu0 %v51
    %107 = vmatprep.subr.mxu0 0.0
    %108 = vmatpush1.msra.mxu0 %v52
    %109 = vmatprep.subr.mxu0 0.0
    %110 = vmatpush1.msra.mxu0 0.0
    %111 = vmatprep.subr.mxu0 0.0
    %112 = vmatpush1.msra.mxu0 0.0
    %113 = vmatprep.subr.mxu0 0.0
    %114 = vmatpush1.msra.mxu0 0.0
    %115 = vmatprep.subr.mxu0 0.0
    %116 = vmatpush1.msra.mxu0 0.0
    %117 = vmatprep.subr.mxu0 0.0
    %118 = vmatpush1.msra.mxu0 0.0
    %119 = vmatprep.subr.mxu0 0.0
    %120 = vmatpush1.msra.mxu0 0.0
    %121 = vmatprep.subr.mxu0 0.0
    %122 = vmatpush1.msra.mxu0 0.0
    %123 = vmatprep.subr.mxu0 0.0
    %124 = vmatpush1.msra.mxu0 0.0
    %125 = vmatprep.subr.mxu0 0.0
    %126 = vmatpush1.msra.mxu0 0.0
    %127 = vmatprep.subr.mxu0 0.0
    %128 = vmatpush1.msra.mxu0 0.0
    %129 = vmatprep.subr.mxu0 0.0
    %130 = vmatpush1.msra.mxu0 0.0
    %131 = vmatprep.subr.mxu0 0.0
    %132 = vmatpush1.msra.mxu0 0.0
    %133 = vmatprep.subr.mxu0 0.0
    %134 = vmatpush1.msra.mxu0 0.0
    %135 = vmatprep.subr.mxu0 0.0
    %136 = vmatpush1.msra.mxu0 0.0
    %137 = vmatprep.subr.mxu0 0.0
    %138 = vmatpush1.msra.mxu0 0.0
    %139 = vmatprep.subr.mxu0 0.0
    %140 = vmatpush1.msra.mxu0 0.0
    %141 = vmatprep.subr.mxu0 0.0
    %142 = vmatpush1.msra.mxu0 0.0
    %143 = vmatprep.subr.mxu0 0.0
    %144 = vmatpush1.msra.mxu0 0.0
    %145 = vmatprep.subr.mxu0 0.0
    %146 = vmatpush1.msra.mxu0 0.0
    %147 = vmatprep.subr.mxu0 0.0
    %148 = vmatpush1.msra.mxu0 0.0
    %149 = vmatprep.subr.mxu0 0.0
    %150 = vmatpush1.msra.mxu0 0.0
    %151 = vmatprep.subr.mxu0 0.0
    %152 = vmatpush1.msra.mxu0 0.0
    %153 = vmatprep.subr.mxu0 0.0
    %154 = vmatpush1.msra.mxu0 0.0
    %155 = vmatprep.subr.mxu0 0.0
    %156 = vmatpush1.msra.mxu0 0.0
    %157 = vmatprep.mubr.f32.mxu0 0.0
    %158 = vmatmul.mubr.f32.gmra.mrb[0].mxu0 %v88
    %v159 = vpop.f32.mrb[0].mxu0
    %v160 = vadd.f32 %v85, %v159
    %v161 = vpop.f32.mrb[0].mxu0
    %162 = vmatprep.mubr.f32.mxu0 0.0
    %163 = vmatmul.mubr.f32.gmra.mrb[0].mxu0 %v91
    %v164 = vpop.f32.mrb[0].mxu0
    %v165 = vadd.f32 %v85, %v164
    %v166 = vpop.f32.mrb[0].mxu0
    %167 = vdwg.mxu0
    %v168 = vmax.f32 %v160, 0.0
    %v169 = vmax.f32 %v165, 0.0
    %v170 = vlaneseq
    %v171 = vshrl.u32 %v170, 7
    %v172 = vsub.s32 0, %v171
    %v173 = vrot.slane %v78, %v172
    %174 = vmatprep.subr.mxu0 0.0
    %175 = vmatpush1.msra.mxu0 %v53
    %176 = vmatprep.subr.mxu0 0.0
    %177 = vmatpush1.msra.mxu0 %v54
    %178 = vmatprep.subr.mxu0 0.0
    %179 = vmatpush1.msra.mxu0 %v55
    %180 = vmatprep.subr.mxu0 0.0
    %181 = vmatpush1.msra.mxu0 %v56
    %182 = vmatprep.subr.mxu0 0.0
    %183 = vmatpush1.msra.mxu0 %v57
    %184 = vmatprep.subr.mxu0 0.0
    %185 = vmatpush1.msra.mxu0 %v58
    %186 = vmatprep.subr.mxu0 0.0
    %187 = vmatpush1.msra.mxu0 %v59
    %188 = vmatprep.subr.mxu0 0.0
    %189 = vmatpush1.msra.mxu0 %v60
    %190 = vmatprep.subr.mxu0 0.0
    %191 = vmatpush1.msra.mxu0 %v61
    %192 = vmatprep.subr.mxu0 0.0
    %193 = vmatpush1.msra.mxu0 %v62
    %194 = vmatprep.subr.mxu0 0.0
    %195 = vmatpush1.msra.mxu0 %v63
    %196 = vmatprep.subr.mxu0 0.0
    %197 = vmatpush1.msra.mxu0 %v64
    %198 = vmatprep.subr.mxu0 0.0
    %199 = vmatpush1.msra.mxu0 %v65
    %200 = vmatprep.subr.mxu0 0.0
    %201 = vmatpush1.msra.mxu0 %v66
    %202 = vmatprep.subr.mxu0 0.0
    %203 = vmatpush1.msra.mxu0 %v67
    %204 = vmatprep.subr.mxu0 0.0
    %205 = vmatpush1.msra.mxu0 %v68
    %206 = vmatprep.subr.mxu0 0.0
    %207 = vmatpush1.msra.mxu0 0.0
    %208 = vmatprep.subr.mxu0 0.0
    %209 = vmatpush1.msra.mxu0 0.0
    %210 = vmatprep.subr.mxu0 0.0
    %211 = vmatpush1.msra.mxu0 0.0
    %212 = vmatprep.subr.mxu0 0.0
    %213 = vmatpush1.msra.mxu0 0.0
    %214 = vmatprep.subr.mxu0 0.0
    %215 = vmatpush1.msra.mxu0 0.0
    %216 = vmatprep.subr.mxu0 0.0
    %217 = vmatpush1.msra.mxu0 0.0
    %218 = vmatprep.subr.mxu0 0.0
    %219 = vmatpush1.msra.mxu0 0.0
    %220 = vmatprep.subr.mxu0 0.0
    %221 = vmatpush1.msra.mxu0 0.0
    %222 = vmatprep.subr.mxu0 0.0
    %223 = vmatpush1.msra.mxu0 0.0
    %224 = vmatprep.subr.mxu0 0.0
    %225 = vmatpush1.msra.mxu0 0.0
    %226 = vmatprep.subr.mxu0 0.0
    %227 = vmatpush1.msra.mxu0 0.0
    %228 = vmatprep.subr.mxu0 0.0
    %229 = vmatpush1.msra.mxu0 0.0
    %230 = vmatprep.subr.mxu0 0.0
    %231 = vmatpush1.msra.mxu0 0.0
    %232 = vmatprep.subr.mxu0 0.0
    %233 = vmatpush1.msra.mxu0 0.0
    %234 = vmatprep.subr.mxu0 0.0
    %235 = vmatpush1.msra.mxu0 0.0
    %236 = vmatprep.subr.mxu0 0.0
    %237 = vmatpush1.msra.mxu0 0.0
    %238 = vmatprep.mubr.f32.mxu0 0.0
    %239 = vmatmul.mubr.f32.gmra.mrb[0].mxu0 %v168
    %v240 = vpop.f32.mrb[0].mxu0
    %v241 = vadd.f32 %v173, %v240
    %v242 = vpop.f32.mrb[0].mxu0
    %243 = vmatprep.mubr.f32.mxu0 0.0
    %244 = vmatmul.mubr.f32.gmra.mrb[0].mxu0 %v169
    %v245 = vpop.f32.mrb[0].mxu0
    %v246 = vadd.f32 %v173, %v245
    %v247 = vpop.f32.mrb[0].mxu0
    %248 = vdwg.mxu0
    %v249 = vld [vmem:[%s1] sm:$0x3]
    %v250 = vld [vmem:[%s2] sm:$0x3]
    %vm251 = vcmask 261120
    %v253 = vsel %vm251, %v249, 0
    %255 = vmatprep.subr.mxu0 0.0
    %256 = vmatpush1.msra.mxu0 %v69
    %257 = vmatprep.subr.mxu0 0.0
    %258 = vmatpush1.msra.mxu0 %v70
    %259 = vmatprep.subr.mxu0 0.0
    %260 = vmatpush1.msra.mxu0 %v71
    %261 = vmatprep.subr.mxu0 0.0
    %262 = vmatpush1.msra.mxu0 %v72
    %263 = vmatprep.subr.mxu0 0.0
    %264 = vmatpush1.msra.mxu0 0.0
    %265 = vmatprep.subr.mxu0 0.0
    %266 = vmatpush1.msra.mxu0 0.0
    %267 = vmatprep.subr.mxu0 0.0
    %268 = vmatpush1.msra.mxu0 0.0
    %269 = vmatprep.subr.mxu0 0.0
    %270 = vmatpush1.msra.mxu0 0.0
    %271 = vmatprep.subr.mxu0 0.0
    %272 = vmatpush1.msra.mxu0 0.0
    %273 = vmatprep.subr.mxu0 0.0
    %274 = vmatpush1.msra.mxu0 0.0
    %275 = vmatprep.subr.mxu0 0.0
    %276 = vmatpush1.msra.mxu0 0.0
    %277 = vmatprep.subr.mxu0 0.0
    %278 = vmatpush1.msra.mxu0 0.0
    %279 = vmatprep.subr.mxu0 0.0
    %280 = vmatpush1.msra.mxu0 0.0
    %281 = vmatprep.subr.mxu0 0.0
    %282 = vmatpush1.msra.mxu0 0.0
    %283 = vmatprep.subr.mxu0 0.0
    %284 = vmatpush1.msra.mxu0 0.0
    %285 = vmatprep.subr.mxu0 0.0
    %286 = vmatpush1.msra.mxu0 0.0
    %287 = vmatprep.subr.mxu0 0.0
    %288 = vmatpush1.msra.mxu0 0.0
    %289 = vmatprep.subr.mxu0 0.0
    %290 = vmatpush1.msra.mxu0 0.0
    %291 = vmatprep.subr.mxu0 0.0
    %292 = vmatpush1.msra.mxu0 0.0
    %293 = vmatprep.subr.mxu0 0.0
    %294 = vmatpush1.msra.mxu0 0.0
    %295 = vmatprep.subr.mxu0 0.0
    %296 = vmatpush1.msra.mxu0 0.0
    %297 = vmatprep.subr.mxu0 0.0
    %298 = vmatpush1.msra.mxu0 0.0
    %299 = vmatprep.subr.mxu0 0.0
    %300 = vmatpush1.msra.mxu0 0.0
    %301 = vmatprep.subr.mxu0 0.0
    %302 = vmatpush1.msra.mxu0 0.0
    %303 = vmatprep.subr.mxu0 0.0
    %304 = vmatpush1.msra.mxu0 0.0
    %305 = vmatprep.subr.mxu0 0.0
    %306 = vmatpush1.msra.mxu0 0.0
    %307 = vmatprep.subr.mxu0 0.0
    %308 = vmatpush1.msra.mxu0 0.0
    %309 = vmatprep.subr.mxu0 0.0
    %310 = vmatpush1.msra.mxu0 0.0
    %311 = vmatprep.subr.mxu0 0.0
    %312 = vmatpush1.msra.mxu0 0.0
    %313 = vmatprep.subr.mxu0 0.0
    %314 = vmatpush1.msra.mxu0 0.0
    %315 = vmatprep.subr.mxu0 0.0
    %316 = vmatpush1.msra.mxu0 0.0
    %317 = vmatprep.subr.mxu0 0.0
    %318 = vmatpush1.msra.mxu0 0.0
    %319 = vmatprep.mubr.f32.mxu0 0.0
    %320 = vmatmul.mubr.f32.gmra.mrb[0].mxu0 %v253
    %v321 = vpop.f32.mrb[0].mxu0
    %v322 = vadd.f32 0.0, %v321
    %v323 = vpop.f32.mrb[0].mxu0
    %324 = vdwg.mxu0
    %v326 = vrot.slane %v322, 1
    %v329 = vadd.f32 %v241, %v322
    %v330 = vadd.f32 %v246, %v326
    %v331 = vxor.u32 %v329, 2147483648
    %v332 = vxor.u32 %v330, 2147483648
    %v333 = vmul.f32 %v331, 1.442695
    %v334 = vpow.pop %v333
    %v335 = vmul.f32 %v332, 1.442695
    %v336 = vpow.pop %v335
    %v337 = vadd.f32 %v334, 1.0
    %v338 = vadd.f32 %v336, 1.0
    %v339 = vrcp.pop %v337
    %v340 = vmul.f32 1.0, %v339
    %v341 = vrcp.pop %v338
    %v342 = vmul.f32 1.0, %v341
    %v343 = vtanh.pop %v329
    %v344 = vtanh.pop %v330
    %v346 = vrot.slane %v250, 1
    %347 = vrot.lane.b32.xlu0 %v250, 32
    %v348 = vpop.permute.xlu0 %347
    %349 = vrot.lane.b32.xlu0 %v346, 32
    %v350 = vpop.permute.xlu0 %349
    %v353 = vmul.f32 %v340, %v348
    %v354 = vmul.f32 %v342, %v350
    %357 = vrot.lane.b32.xlu0 %v343, 64
    %v358 = vpop.permute.xlu0 %357
    %359 = vrot.lane.b32.xlu0 %v344, 64
    %v360 = vpop.permute.xlu0 %359
    %v363 = vmul.f32 %v340, %v358
    %v364 = vmul.f32 %v342, %v360
    %367 = vrot.lane.b32.xlu0 %v363, 32
    %v368 = vpop.permute.xlu0 %367
    %369 = vrot.lane.b32.xlu0 %v364, 32
    %v370 = vpop.permute.xlu0 %369
    %v373 = vadd.f32 %v353, %v368
    %v374 = vadd.f32 %v354, %v370
    %v375 = vtanh.pop %v373
    %v376 = vtanh.pop %v374
    %379 = vrot.lane.b32.xlu0 %v375, 64
    %v380 = vpop.permute.xlu0 %379
    %381 = vrot.lane.b32.xlu0 %v376, 64
    %v382 = vpop.permute.xlu0 %381
    %v385 = vmul.f32 %v340, %v380
    %v386 = vmul.f32 %v342, %v382
    %v389 = vrot.slane %v386, 7
    %vm390 = vcmask 1041409
    %v391 = vsel %vm390, %v389, %v385
    %392 = vrot.lane.b32.xlu0 %v391, 32
    %v393 = vpop.permute.xlu0 %392
    %395 = vst [vmem:[#allocation2] ss:$8 sm:$0x3] %v393
    %396 = vst [vmem:[#allocation2] ss:$8 sm:$0x0] %v393
    %v397 = vsel %vm251, %v393, 0
    %399 = vmatprep.subr.mxu0 0.0
    %400 = vmatpush1.msra.mxu0 %v69
    %401 = vmatprep.subr.mxu0 0.0
    %402 = vmatpush1.msra.mxu0 %v70
    %403 = vmatprep.subr.mxu0 0.0
    %404 = vmatpush1.msra.mxu0 %v71
    %405 = vmatprep.subr.mxu0 0.0
    %406 = vmatpush1.msra.mxu0 %v72
    %407 = vmatprep.subr.mxu0 0.0
    %408 = vmatpush1.msra.mxu0 0.0
    %409 = vmatprep.subr.mxu0 0.0
    %410 = vmatpush1.msra.mxu0 0.0
    %411 = vmatprep.subr.mxu0 0.0
    %412 = vmatpush1.msra.mxu0 0.0
    %413 = vmatprep.subr.mxu0 0.0
    %414 = vmatpush1.msra.mxu0 0.0
    %415 = vmatprep.subr.mxu0 0.0
    %416 = vmatpush1.msra.mxu0 0.0
    %417 = vmatprep.subr.mxu0 0.0
    %418 = vmatpush1.msra.mxu0 0.0
    %419 = vmatprep.subr.mxu0 0.0
    %420 = vmatpush1.msra.mxu0 0.0
    %421 = vmatprep.subr.mxu0 0.0
    %422 = vmatpush1.msra.mxu0 0.0
    %423 = vmatprep.subr.mxu0 0.0
    %424 = vmatpush1.msra.mxu0 0.0
    %425 = vmatprep.subr.mxu0 0.0
    %426 = vmatpush1.msra.mxu0 0.0
    %427 = vmatprep.subr.mxu0 0.0
    %428 = vmatpush1.msra.mxu0 0.0
    %429 = vmatprep.subr.mxu0 0.0
    %430 = vmatpush1.msra.mxu0 0.0
    %431 = vmatprep.subr.mxu0 0.0
    %432 = vmatpush1.msra.mxu0 0.0
    %433 = vmatprep.subr.mxu0 0.0
    %434 = vmatpush1.msra.mxu0 0.0
    %435 = vmatprep.subr.mxu0 0.0
    %436 = vmatpush1.msra.mxu0 0.0
    %437 = vmatprep.subr.mxu0 0.0
    %438 = vmatpush1.msra.mxu0 0.0
    %439 = vmatprep.subr.mxu0 0.0
    %440 = vmatpush1.msra.mxu0 0.0
    %441 = vmatprep.subr.mxu0 0.0
    %442 = vmatpush1.msra.mxu0 0.0
    %443 = vmatprep.subr.mxu0 0.0
    %444 = vmatpush1.msra.mxu0 0.0
    %445 = vmatprep.subr.mxu0 0.0
    %446 = vmatpush1.msra.mxu0 0.0
    %447 = vmatprep.subr.mxu0 0.0
    %448 = vmatpush1.msra.mxu0 0.0
    %449 = vmatprep.subr.mxu0 0.0
    %450 = vmatpush1.msra.mxu0 0.0
    %451 = vmatprep.subr.mxu0 0.0
    %452 = vmatpush1.msra.mxu0 0.0
    %453 = vmatprep.subr.mxu0 0.0
    %454 = vmatpush1.msra.mxu0 0.0
    %455 = vmatprep.subr.mxu0 0.0
    %456 = vmatpush1.msra.mxu0 0.0
    %457 = vmatprep.subr.mxu0 0.0
    %458 = vmatpush1.msra.mxu0 0.0
    %459 = vmatprep.subr.mxu0 0.0
    %460 = vmatpush1.msra.mxu0 0.0
    %461 = vmatprep.subr.mxu0 0.0
    %462 = vmatpush1.msra.mxu0 0.0
    %463 = vmatprep.mubr.f32.mxu0 0.0
    %464 = vmatmul.mubr.f32.gmra.mrb[0].mxu0 %v397
    %v465 = vpop.f32.mrb[0].mxu0
    %v466 = vadd.f32 0.0, %v465
    %v467 = vpop.f32.mrb[0].mxu0
    %468 = vdwg.mxu0
    %v470 = vrot.slane %v466, 7
    %v473 = vadd.f32 %v241, %v470
    %v474 = vadd.f32 %v246, %v466
    %v475 = vxor.u32 %v473, 2147483648
    %v476 = vxor.u32 %v474, 2147483648
    %v477 = vmul.f32 %v475, 1.442695
    %v478 = vpow.pop %v477
    %v479 = vmul.f32 %v476, 1.442695
    %v480 = vpow.pop %v479
    %v481 = vadd.f32 %v478, 1.0
    %v482 = vadd.f32 %v480, 1.0
    %v483 = vrcp.pop %v481
    %v484 = vmul.f32 1.0, %v483
    %v485 = vrcp.pop %v482
    %v486 = vmul.f32 1.0, %v485
    %v487 = vtanh.pop %v473
    %v488 = vtanh.pop %v474
    %v491 = vrot.slane %v373, 7
    %v492 = vrot.slane %v374, 7
    %v495 = vmul.f32 %v484, %v491
    %v496 = vmul.f32 %v486, %v492
    %499 = vrot.lane.b32.xlu0 %v487, 64
    %v500 = vpop.permute.xlu0 %499
    %501 = vrot.lane.b32.xlu0 %v488, 64
    %v502 = vpop.permute.xlu0 %501
    %v505 = vmul.f32 %v484, %v500
    %v506 = vmul.f32 %v486, %v502
    %509 = vrot.lane.b32.xlu0 %v505, 32
    %v510 = vpop.permute.xlu0 %509
    %511 = vrot.lane.b32.xlu0 %v506, 32
    %v512 = vpop.permute.xlu0 %511
    %v515 = vadd.f32 %v495, %v510
    %v516 = vadd.f32 %v496, %v512
    %v517 = vtanh.pop %v515
    %v518 = vtanh.pop %v516
    %521 = vrot.lane.b32.xlu0 %v517, 64
    %v522 = vpop.permute.xlu0 %521
    %523 = vrot.lane.b32.xlu0 %v518, 64
    %v524 = vpop.permute.xlu0 %523
    %v527 = vmul.f32 %v484, %v522
    %v528 = vmul.f32 %v486, %v524
    %v531 = vrot.slane %v527, 1
    %v532 = vsel %vm390, %v528, %v531
    %533 = vrot.lane.b32.xlu0 %v532, 32
    %v534 = vpop.permute.xlu0 %533
    %s536 = scalar_lea.vmem [#allocation2], 1
    %537 = vst [vmem:[%s536] ss:$8 sm:$0x3] %v534
    %538 = vst [vmem:[%s536] ss:$8 sm:$0x0] %v534
    %v539 = vsel %vm251, %v534, 0
    %541 = vmatprep.subr.mxu0 0.0
    %542 = vmatpush1.msra.mxu0 %v69
    %543 = vmatprep.subr.mxu0 0.0
    %544 = vmatpush1.msra.mxu0 %v70
    %545 = vmatprep.subr.mxu0 0.0
    %546 = vmatpush1.msra.mxu0 %v71
    %547 = vmatprep.subr.mxu0 0.0
    %548 = vmatpush1.msra.mxu0 %v72
    %549 = vmatprep.subr.mxu0 0.0
    %550 = vmatpush1.msra.mxu0 0.0
    %551 = vmatprep.subr.mxu0 0.0
    %552 = vmatpush1.msra.mxu0 0.0
    %553 = vmatprep.subr.mxu0 0.0
    %554 = vmatpush1.msra.mxu0 0.0
    %555 = vmatprep.subr.mxu0 0.0
    %556 = vmatpush1.msra.mxu0 0.0
    %557 = vmatprep.subr.mxu0 0.0
    %558 = vmatpush1.msra.mxu0 0.0
    %559 = vmatprep.subr.mxu0 0.0
    %560 = vmatpush1.msra.mxu0 0.0
    %561 = vmatprep.subr.mxu0 0.0
    %562 = vmatpush1.msra.mxu0 0.0
    %563 = vmatprep.subr.mxu0 0.0
    %564 = vmatpush1.msra.mxu0 0.0
    %565 = vmatprep.subr.mxu0 0.0
    %566 = vmatpush1.msra.mxu0 0.0
    %567 = vmatprep.subr.mxu0 0.0
    %568 = vmatpush1.msra.mxu0 0.0
    %569 = vmatprep.subr.mxu0 0.0
    %570 = vmatpush1.msra.mxu0 0.0
    %571 = vmatprep.subr.mxu0 0.0
    %572 = vmatpush1.msra.mxu0 0.0
    %573 = vmatprep.subr.mxu0 0.0
    %574 = vmatpush1.msra.mxu0 0.0
    %575 = vmatprep.subr.mxu0 0.0
    %576 = vmatpush1.msra.mxu0 0.0
    %577 = vmatprep.subr.mxu0 0.0
    %578 = vmatpush1.msra.mxu0 0.0
    %579 = vmatprep.subr.mxu0 0.0
    %580 = vmatpush1.msra.mxu0 0.0
    %581 = vmatprep.subr.mxu0 0.0
    %582 = vmatpush1.msra.mxu0 0.0
    %583 = vmatprep.subr.mxu0 0.0
    %584 = vmatpush1.msra.mxu0 0.0
    %585 = vmatprep.subr.mxu0 0.0
    %586 = vmatpush1.msra.mxu0 0.0
    %587 = vmatprep.subr.mxu0 0.0
    %588 = vmatpush1.msra.mxu0 0.0
    %589 = vmatprep.subr.mxu0 0.0
    %590 = vmatpush1.msra.mxu0 0.0
    %591 = vmatprep.subr.mxu0 0.0
    %592 = vmatpush1.msra.mxu0 0.0
    %593 = vmatprep.subr.mxu0 0.0
    %594 = vmatpush1.msra.mxu0 0.0
    %595 = vmatprep.subr.mxu0 0.0
    %596 = vmatpush1.msra.mxu0 0.0
    %597 = vmatprep.subr.mxu0 0.0
    %598 = vmatpush1.msra.mxu0 0.0
    %599 = vmatprep.subr.mxu0 0.0
    %600 = vmatpush1.msra.mxu0 0.0
    %601 = vmatprep.subr.mxu0 0.0
    %602 = vmatpush1.msra.mxu0 0.0
    %603 = vmatprep.subr.mxu0 0.0
    %604 = vmatpush1.msra.mxu0 0.0
    %605 = vmatprep.mubr.f32.mxu0 0.0
    %606 = vmatmul.mubr.f32.gmra.mrb[0].mxu0 %v539
    %v607 = vpop.f32.mrb[0].mxu0
    %v608 = vadd.f32 0.0, %v607
    %v609 = vpop.f32.mrb[0].mxu0
    %610 = vdwg.mxu0
    %v612 = vrot.slane %v608, 6
    %v613 = vrot.slane %v608, 7
    %v616 = vadd.f32 %v241, %v612
    %v617 = vadd.f32 %v246, %v613
    %v618 = vxor.u32 %v616, 2147483648
    %v619 = vxor.u32 %v617, 2147483648
    %v620 = vmul.f32 %v618, 1.442695
    %v621 = vpow.pop %v620
    %v622 = vmul.f32 %v619, 1.442695
    %v623 = vpow.pop %v622
    %v624 = vadd.f32 %v621, 1.0
    %v625 = vadd.f32 %v623, 1.0
    %v626 = vrcp.pop %v624
    %v627 = vmul.f32 1.0, %v626
    %v628 = vrcp.pop %v625
    %v629 = vmul.f32 1.0, %v628
    %v630 = vtanh.pop %v616
    %v631 = vtanh.pop %v617
    %v634 = vrot.slane %v515, 7
    %v635 = vrot.slane %v516, 7
    %v638 = vmul.f32 %v627, %v634
    %v639 = vmul.f32 %v629, %v635
    %642 = vrot.lane.b32.xlu0 %v630, 64
    %v643 = vpop.permute.xlu0 %642
    %644 = vrot.lane.b32.xlu0 %v631, 64
    %v645 = vpop.permute.xlu0 %644
    %v648 = vmul.f32 %v627, %v643
    %v649 = vmul.f32 %v629, %v645
    %652 = vrot.lane.b32.xlu0 %v648, 32
    %v653 = vpop.permute.xlu0 %652
    %654 = vrot.lane.b32.xlu0 %v649, 32
    %v655 = vpop.permute.xlu0 %654
    %v658 = vadd.f32 %v638, %v653
    %v659 = vadd.f32 %v639, %v655
    %v660 = vtanh.pop %v658
    %v661 = vtanh.pop %v659
    %664 = vrot.lane.b32.xlu0 %v660, 64
    %v665 = vpop.permute.xlu0 %664
    %666 = vrot.lane.b32.xlu0 %v661, 64
    %v667 = vpop.permute.xlu0 %666
    %v670 = vmul.f32 %v627, %v665
    %v671 = vmul.f32 %v629, %v667
    %v674 = vrot.slane %v670, 2
    %v675 = vrot.slane %v671, 1
    %v676 = vsel %vm390, %v675, %v674
    %677 = vrot.lane.b32.xlu0 %v676, 32
    %v678 = vpop.permute.xlu0 %677
    %s680 = scalar_lea.vmem [#allocation2], 2
    %681 = vst [vmem:[%s680] ss:$8 sm:$0x3] %v678
    %682 = vst [vmem:[%s680] ss:$8 sm:$0x0] %v678
    %v683 = vsel %vm251, %v678, 0
    %685 = vmatprep.subr.mxu0 0.0
    %686 = vmatpush1.msra.mxu0 %v69
    %687 = vmatprep.subr.mxu0 0.0
    %688 = vmatpush1.msra.mxu0 %v70
    %689 = vmatprep.subr.mxu0 0.0
    %690 = vmatpush1.msra.mxu0 %v71
    %691 = vmatprep.subr.mxu0 0.0
    %692 = vmatpush1.msra.mxu0 %v72
    %693 = vmatprep.subr.mxu0 0.0
    %694 = vmatpush1.msra.mxu0 0.0
    %695 = vmatprep.subr.mxu0 0.0
    %696 = vmatpush1.msra.mxu0 0.0
    %697 = vmatprep.subr.mxu0 0.0
    %698 = vmatpush1.msra.mxu0 0.0
    %699 = vmatprep.subr.mxu0 0.0
    %700 = vmatpush1.msra.mxu0 0.0
    %701 = vmatprep.subr.mxu0 0.0
    %702 = vmatpush1.msra.mxu0 0.0
    %703 = vmatprep.subr.mxu0 0.0
    %704 = vmatpush1.msra.mxu0 0.0
    %705 = vmatprep.subr.mxu0 0.0
    %706 = vmatpush1.msra.mxu0 0.0
    %707 = vmatprep.subr.mxu0 0.0
    %708 = vmatpush1.msra.mxu0 0.0
    %709 = vmatprep.subr.mxu0 0.0
    %710 = vmatpush1.msra.mxu0 0.0
    %711 = vmatprep.subr.mxu0 0.0
    %712 = vmatpush1.msra.mxu0 0.0
    %713 = vmatprep.subr.mxu0 0.0
    %714 = vmatpush1.msra.mxu0 0.0
    %715 = vmatprep.subr.mxu0 0.0
    %716 = vmatpush1.msra.mxu0 0.0
    %717 = vmatprep.subr.mxu0 0.0
    %718 = vmatpush1.msra.mxu0 0.0
    %719 = vmatprep.subr.mxu0 0.0
    %720 = vmatpush1.msra.mxu0 0.0
    %721 = vmatprep.subr.mxu0 0.0
    %722 = vmatpush1.msra.mxu0 0.0
    %723 = vmatprep.subr.mxu0 0.0
    %724 = vmatpush1.msra.mxu0 0.0
    %725 = vmatprep.subr.mxu0 0.0
    %726 = vmatpush1.msra.mxu0 0.0
    %727 = vmatprep.subr.mxu0 0.0
    %728 = vmatpush1.msra.mxu0 0.0
    %729 = vmatprep.subr.mxu0 0.0
    %730 = vmatpush1.msra.mxu0 0.0
    %731 = vmatprep.subr.mxu0 0.0
    %732 = vmatpush1.msra.mxu0 0.0
    %733 = vmatprep.subr.mxu0 0.0
    %734 = vmatpush1.msra.mxu0 0.0
    %735 = vmatprep.subr.mxu0 0.0
    %736 = vmatpush1.msra.mxu0 0.0
    %737 = vmatprep.subr.mxu0 0.0
    %738 = vmatpush1.msra.mxu0 0.0
    %739 = vmatprep.subr.mxu0 0.0
    %740 = vmatpush1.msra.mxu0 0.0
    %741 = vmatprep.subr.mxu0 0.0
    %742 = vmatpush1.msra.mxu0 0.0
    %743 = vmatprep.subr.mxu0 0.0
    %744 = vmatpush1.msra.mxu0 0.0
    %745 = vmatprep.subr.mxu0 0.0
    %746 = vmatpush1.msra.mxu0 0.0
    %747 = vmatprep.subr.mxu0 0.0
    %748 = vmatpush1.msra.mxu0 0.0
    %749 = vmatprep.mubr.f32.mxu0 0.0
    %750 = vmatmul.mubr.f32.gmra.mrb[0].mxu0 %v683
    %v751 = vpop.f32.mrb[0].mxu0
    %v752 = vadd.f32 0.0, %v751
    %v753 = vpop.f32.mrb[0].mxu0
    %754 = vdwg.mxu0
    %v756 = vrot.slane %v752, 5
    %v757 = vrot.slane %v752, 6
    %v760 = vadd.f32 %v241, %v756
    %v761 = vadd.f32 %v246, %v757
    %v762 = vxor.u32 %v760, 2147483648
    %v763 = vxor.u32 %v761, 2147483648
    %v764 = vmul.f32 %v762, 1.442695
    %v765 = vpow.pop %v764
    %v766 = vmul.f32 %v763, 1.442695
    %v767 = vpow.pop %v766
    %v768 = vadd.f32 %v765, 1.0
    %v769 = vadd.f32 %v767, 1.0
    %v770 = vrcp.pop %v768
    %v771 = vmul.f32 1.0, %v770
    %v772 = vrcp.pop %v769
    %v773 = vmul.f32 1.0, %v772
    %v774 = vtanh.pop %v760
    %v775 = vtanh.pop %v761
    %v778 = vrot.slane %v658, 7
    %v779 = vrot.slane %v659, 7
    %v782 = vmul.f32 %v771, %v778
    %v783 = vmul.f32 %v773, %v779
    %786 = vrot.lane.b32.xlu0 %v774, 64
    %v787 = vpop.permute.xlu0 %786
    %788 = vrot.lane.b32.xlu0 %v775, 64
    %v789 = vpop.permute.xlu0 %788
    %v792 = vmul.f32 %v771, %v787
    %v793 = vmul.f32 %v773, %v789
    %796 = vrot.lane.b32.xlu0 %v792, 32
    %v797 = vpop.permute.xlu0 %796
    %798 = vrot.lane.b32.xlu0 %v793, 32
    %v799 = vpop.permute.xlu0 %798
    %v802 = vadd.f32 %v782, %v797
    %v803 = vadd.f32 %v783, %v799
    %v804 = vtanh.pop %v802
    %v805 = vtanh.pop %v803
    %808 = vrot.lane.b32.xlu0 %v804, 64
    %v809 = vpop.permute.xlu0 %808
    %810 = vrot.lane.b32.xlu0 %v805, 64
    %v811 = vpop.permute.xlu0 %810
    %v814 = vmul.f32 %v771, %v809
    %v815 = vmul.f32 %v773, %v811
    %v818 = vrot.slane %v814, 3
    %v819 = vrot.slane %v815, 2
    %v820 = vsel %vm390, %v819, %v818
    %821 = vrot.lane.b32.xlu0 %v820, 32
    %v822 = vpop.permute.xlu0 %821
    %s824 = scalar_lea.vmem [#allocation2], 3
    %825 = vst [vmem:[%s824] ss:$8 sm:$0x3] %v822
    %826 = vst [vmem:[%s824] ss:$8 sm:$0x0] %v822
    %v827 = vsel %vm251, %v822, 0
    %829 = vmatprep.subr.mxu0 0.0
    %830 = vmatpush1.msra.mxu0 %v69
    %831 = vmatprep.subr.mxu0 0.0
    %832 = vmatpush1.msra.mxu0 %v70
    %833 = vmatprep.subr.mxu0 0.0
    %834 = vmatpush1.msra.mxu0 %v71
    %835 = vmatprep.subr.mxu0 0.0
    %836 = vmatpush1.msra.mxu0 %v72
    %837 = vmatprep.subr.mxu0 0.0
    %838 = vmatpush1.msra.mxu0 0.0
    %839 = vmatprep.subr.mxu0 0.0
    %840 = vmatpush1.msra.mxu0 0.0
    %841 = vmatprep.subr.mxu0 0.0
    %842 = vmatpush1.msra.mxu0 0.0
    %843 = vmatprep.subr.mxu0 0.0
    %844 = vmatpush1.msra.mxu0 0.0
    %845 = vmatprep.subr.mxu0 0.0
    %846 = vmatpush1.msra.mxu0 0.0
    %847 = vmatprep.subr.mxu0 0.0
    %848 = vmatpush1.msra.mxu0 0.0
    %849 = vmatprep.subr.mxu0 0.0
    %850 = vmatpush1.msra.mxu0 0.0
    %851 = vmatprep.subr.mxu0 0.0
    %852 = vmatpush1.msra.mxu0 0.0
    %853 = vmatprep.subr.mxu0 0.0
    %854 = vmatpush1.msra.mxu0 0.0
    %855 = vmatprep.subr.mxu0 0.0
    %856 = vmatpush1.msra.mxu0 0.0
    %857 = vmatprep.subr.mxu0 0.0
    %858 = vmatpush1.msra.mxu0 0.0
    %859 = vmatprep.subr.mxu0 0.0
    %860 = vmatpush1.msra.mxu0 0.0
    %861 = vmatprep.subr.mxu0 0.0
    %862 = vmatpush1.msra.mxu0 0.0
    %863 = vmatprep.subr.mxu0 0.0
    %864 = vmatpush1.msra.mxu0 0.0
    %865 = vmatprep.subr.mxu0 0.0
    %866 = vmatpush1.msra.mxu0 0.0
    %867 = vmatprep.subr.mxu0 0.0
    %868 = vmatpush1.msra.mxu0 0.0
    %869 = vmatprep.subr.mxu0 0.0
    %870 = vmatpush1.msra.mxu0 0.0
    %871 = vmatprep.subr.mxu0 0.0
    %872 = vmatpush1.msra.mxu0 0.0
    %873 = vmatprep.subr.mxu0 0.0
    %874 = vmatpush1.msra.mxu0 0.0
    %875 = vmatprep.subr.mxu0 0.0
    %876 = vmatpush1.msra.mxu0 0.0
    %877 = vmatprep.subr.mxu0 0.0
    %878 = vmatpush1.msra.mxu0 0.0
    %879 = vmatprep.subr.mxu0 0.0
    %880 = vmatpush1.msra.mxu0 0.0
    %881 = vmatprep.subr.mxu0 0.0
    %882 = vmatpush1.msra.mxu0 0.0
    %883 = vmatprep.subr.mxu0 0.0
    %884 = vmatpush1.msra.mxu0 0.0
    %885 = vmatprep.subr.mxu0 0.0
    %886 = vmatpush1.msra.mxu0 0.0
    %887 = vmatprep.subr.mxu0 0.0
    %888 = vmatpush1.msra.mxu0 0.0
    %889 = vmatprep.subr.mxu0 0.0
    %890 = vmatpush1.msra.mxu0 0.0
    %891 = vmatprep.subr.mxu0 0.0
    %892 = vmatpush1.msra.mxu0 0.0
    %893 = vmatprep.mubr.f32.mxu0 0.0
    %894 = vmatmul.mubr.f32.gmra.mrb[0].mxu0 %v827
    %v895 = vpop.f32.mrb[0].mxu0
    %v896 = vadd.f32 0.0, %v895
    %v897 = vpop.f32.mrb[0].mxu0
    %898 = vdwg.mxu0
    %v900 = vrot.slane %v896, 4
    %v901 = vrot.slane %v896, 5
    %v904 = vadd.f32 %v241, %v900
    %v905 = vadd.f32 %v246, %v901
    %v906 = vxor.u32 %v904, 2147483648
    %v907 = vxor.u32 %v905, 2147483648
    %v908 = vmul.f32 %v906, 1.442695
    %v909 = vpow.pop %v908
    %v910 = vmul.f32 %v907, 1.442695
    %v911 = vpow.pop %v910
    %v912 = vadd.f32 %v909, 1.0
    %v913 = vadd.f32 %v911, 1.0
    %v914 = vrcp.pop %v912
    %v915 = vmul.f32 1.0, %v914
    %v916 = vrcp.pop %v913
    %v917 = vmul.f32 1.0, %v916
    %v918 = vtanh.pop %v904
    %v919 = vtanh.pop %v905
    %v922 = vrot.slane %v802, 7
    %v923 = vrot.slane %v803, 7
    %v926 = vmul.f32 %v915, %v922
    %v927 = vmul.f32 %v917, %v923
    %930 = vrot.lane.b32.xlu0 %v918, 64
    %v931 = vpop.permute.xlu0 %930
    %932 = vrot.lane.b32.xlu0 %v919, 64
    %v933 = vpop.permute.xlu0 %932
    %v936 = vmul.f32 %v915, %v931
    %v937 = vmul.f32 %v917, %v933
    %940 = vrot.lane.b32.xlu0 %v936, 32
    %v941 = vpop.permute.xlu0 %940
    %942 = vrot.lane.b32.xlu0 %v937, 32
    %v943 = vpop.permute.xlu0 %942
    %v946 = vadd.f32 %v926, %v941
    %v947 = vadd.f32 %v927, %v943
    %v948 = vtanh.pop %v946
    %v949 = vtanh.pop %v947
    %952 = vrot.lane.b32.xlu0 %v948, 64
    %v953 = vpop.permute.xlu0 %952
    %954 = vrot.lane.b32.xlu0 %v949, 64
    %v955 = vpop.permute.xlu0 %954
    %v958 = vmul.f32 %v915, %v953
    %v959 = vmul.f32 %v917, %v955
    %v962 = vrot.slane %v958, 4
    %v963 = vrot.slane %v959, 3
    %v964 = vsel %vm390, %v963, %v962
    %965 = vrot.lane.b32.xlu0 %v964, 32
    %v966 = vpop.permute.xlu0 %965
    %s968 = scalar_lea.vmem [#allocation2], 4
    %969 = vst [vmem:[%s968] ss:$8 sm:$0x3] %v966
    %970 = vst [vmem:[%s968] ss:$8 sm:$0x0] %v966
    %v971 = vsel %vm251, %v966, 0
    %973 = vmatprep.subr.mxu0 0.0
    %974 = vmatpush1.msra.mxu0 %v69
    %975 = vmatprep.subr.mxu0 0.0
    %976 = vmatpush1.msra.mxu0 %v70
    %977 = vmatprep.subr.mxu0 0.0
    %978 = vmatpush1.msra.mxu0 %v71
    %979 = vmatprep.subr.mxu0 0.0
    %980 = vmatpush1.msra.mxu0 %v72
    %981 = vmatprep.subr.mxu0 0.0
    %982 = vmatpush1.msra.mxu0 0.0
    %983 = vmatprep.subr.mxu0 0.0
    %984 = vmatpush1.msra.mxu0 0.0
    %985 = vmatprep.subr.mxu0 0.0
    %986 = vmatpush1.msra.mxu0 0.0
    %987 = vmatprep.subr.mxu0 0.0
    %988 = vmatpush1.msra.mxu0 0.0
    %989 = vmatprep.subr.mxu0 0.0
    %990 = vmatpush1.msra.mxu0 0.0
    %991 = vmatprep.subr.mxu0 0.0
    %992 = vmatpush1.msra.mxu0 0.0
    %993 = vmatprep.subr.mxu0 0.0
    %994 = vmatpush1.msra.mxu0 0.0
    %995 = vmatprep.subr.mxu0 0.0
    %996 = vmatpush1.msra.mxu0 0.0
    %997 = vmatprep.subr.mxu0 0.0
    %998 = vmatpush1.msra.mxu0 0.0
    %999 = vmatprep.subr.mxu0 0.0
    %1000 = vmatpush1.msra.mxu0 0.0
    %1001 = vmatprep.subr.mxu0 0.0
    %1002 = vmatpush1.msra.mxu0 0.0
    %1003 = vmatprep.subr.mxu0 0.0
    %1004 = vmatpush1.msra.mxu0 0.0
    %1005 = vmatprep.subr.mxu0 0.0
    %1006 = vmatpush1.msra.mxu0 0.0
    %1007 = vmatprep.subr.mxu0 0.0
    %1008 = vmatpush1.msra.mxu0 0.0
    %1009 = vmatprep.subr.mxu0 0.0
    %1010 = vmatpush1.msra.mxu0 0.0
    %1011 = vmatprep.subr.mxu0 0.0
    %1012 = vmatpush1.msra.mxu0 0.0
    %1013 = vmatprep.subr.mxu0 0.0
    %1014 = vmatpush1.msra.mxu0 0.0
    %1015 = vmatprep.subr.mxu0 0.0
    %1016 = vmatpush1.msra.mxu0 0.0
    %1017 = vmatprep.subr.mxu0 0.0
    %1018 = vmatpush1.msra.mxu0 0.0
    %1019 = vmatprep.subr.mxu0 0.0
    %1020 = vmatpush1.msra.mxu0 0.0
    %1021 = vmatprep.subr.mxu0 0.0
    %1022 = vmatpush1.msra.mxu0 0.0
    %1023 = vmatprep.subr.mxu0 0.0
    %1024 = vmatpush1.msra.mxu0 0.0
    %1025 = vmatprep.subr.mxu0 0.0
    %1026 = vmatpush1.msra.mxu0 0.0
    %1027 = vmatprep.subr.mxu0 0.0
    %1028 = vmatpush1.msra.mxu0 0.0
    %1029 = vmatprep.subr.mxu0 0.0
    %1030 = vmatpush1.msra.mxu0 0.0
    %1031 = vmatprep.subr.mxu0 0.0
    %1032 = vmatpush1.msra.mxu0 0.0
    %1033 = vmatprep.subr.mxu0 0.0
    %1034 = vmatpush1.msra.mxu0 0.0
    %1035 = vmatprep.subr.mxu0 0.0
    %1036 = vmatpush1.msra.mxu0 0.0
    %1037 = vmatprep.mubr.f32.mxu0 0.0
    %1038 = vmatmul.mubr.f32.gmra.mrb[0].mxu0 %v971
    %v1039 = vpop.f32.mrb[0].mxu0
    %v1040 = vadd.f32 0.0, %v1039
    %v1041 = vpop.f32.mrb[0].mxu0
    %1042 = vdwg.mxu0
    %v1044 = vrot.slane %v1040, 3
    %v1045 = vrot.slane %v1040, 4
    %v1048 = vadd.f32 %v241, %v1044
    %v1049 = vadd.f32 %v246, %v1045
    %v1050 = vxor.u32 %v1048, 2147483648
    %v1051 = vxor.u32 %v1049, 2147483648
    %v1052 = vmul.f32 %v1050, 1.442695
    %v1053 = vpow.pop %v1052
    %v1054 = vmul.f32 %v1051, 1.442695
    %v1055 = vpow.pop %v1054
    %v1056 = vadd.f32 %v1053, 1.0
    %v1057 = vadd.f32 %v1055, 1.0
    %v1058 = vrcp.pop %v1056
    %v1059 = vmul.f32 1.0, %v1058
    %v1060 = vrcp.pop %v1057
    %v1061 = vmul.f32 1.0, %v1060
    %v1062 = vtanh.pop %v1048
    %v1063 = vtanh.pop %v1049
    %v1066 = vrot.slane %v946, 7
    %v1067 = vrot.slane %v947, 7
    %v1070 = vmul.f32 %v1059, %v1066
    %v1071 = vmul.f32 %v1061, %v1067
    %1074 = vrot.lane.b32.xlu0 %v1062, 64
    %v1075 = vpop.permute.xlu0 %1074
    %1076 = vrot.lane.b32.xlu0 %v1063, 64
    %v1077 = vpop.permute.xlu0 %1076
    %v1080 = vmul.f32 %v1059, %v1075
    %v1081 = vmul.f32 %v1061, %v1077
    %1084 = vrot.lane.b32.xlu0 %v1080, 32
    %v1085 = vpop.permute.xlu0 %1084
    %1086 = vrot.lane.b32.xlu0 %v1081, 32
    %v1087 = vpop.permute.xlu0 %1086
    %v1090 = vadd.f32 %v1070, %v1085
    %v1091 = vadd.f32 %v1071, %v1087
    %v1092 = vtanh.pop %v1090
    %v1093 = vtanh.pop %v1091
    %1096 = vrot.lane.b32.xlu0 %v1092, 64
    %v1097 = vpop.permute.xlu0 %1096
    %1098 = vrot.lane.b32.xlu0 %v1093, 64
    %v1099 = vpop.permute.xlu0 %1098
    %v1102 = vmul.f32 %v1059, %v1097
    %v1103 = vmul.f32 %v1061, %v1099
    %v1106 = vrot.slane %v1102, 5
    %v1107 = vrot.slane %v1103, 4
    %v1108 = vsel %vm390, %v1107, %v1106
    %1109 = vrot.lane.b32.xlu0 %v1108, 32
    %v1110 = vpop.permute.xlu0 %1109
    %s1112 = scalar_lea.vmem [#allocation2], 5
    %1113 = vst [vmem:[%s1112] ss:$8 sm:$0x3] %v1110
    %1114 = vst [vmem:[%s1112] ss:$8 sm:$0x0] %v1110
    %v1115 = vsel %vm251, %v1110, 0
    %1117 = vmatprep.subr.mxu0 0.0
    %1118 = vmatpush1.msra.mxu0 %v69
    %1119 = vmatprep.subr.mxu0 0.0
    %1120 = vmatpush1.msra.mxu0 %v70
    %1121 = vmatprep.subr.mxu0 0.0
    %1122 = vmatpush1.msra.mxu0 %v71
    %1123 = vmatprep.subr.mxu0 0.0
    %1124 = vmatpush1.msra.mxu0 %v72
    %1125 = vmatprep.subr.mxu0 0.0
    %1126 = vmatpush1.msra.mxu0 0.0
    %1127 = vmatprep.subr.mxu0 0.0
    %1128 = vmatpush1.msra.mxu0 0.0
    %1129 = vmatprep.subr.mxu0 0.0
    %1130 = vmatpush1.msra.mxu0 0.0
    %1131 = vmatprep.subr.mxu0 0.0
    %1132 = vmatpush1.msra.mxu0 0.0
    %1133 = vmatprep.subr.mxu0 0.0
    %1134 = vmatpush1.msra.mxu0 0.0
    %1135 = vmatprep.subr.mxu0 0.0
    %1136 = vmatpush1.msra.mxu0 0.0
    %1137 = vmatprep.subr.mxu0 0.0
    %1138 = vmatpush1.msra.mxu0 0.0
    %1139 = vmatprep.subr.mxu0 0.0
    %1140 = vmatpush1.msra.mxu0 0.0
    %1141 = vmatprep.subr.mxu0 0.0
    %1142 = vmatpush1.msra.mxu0 0.0
    %1143 = vmatprep.subr.mxu0 0.0
    %1144 = vmatpush1.msra.mxu0 0.0
    %1145 = vmatprep.subr.mxu0 0.0
    %1146 = vmatpush1.msra.mxu0 0.0
    %1147 = vmatprep.subr.mxu0 0.0
    %1148 = vmatpush1.msra.mxu0 0.0
    %1149 = vmatprep.subr.mxu0 0.0
    %1150 = vmatpush1.msra.mxu0 0.0
    %1151 = vmatprep.subr.mxu0 0.0
    %1152 = vmatpush1.msra.mxu0 0.0
    %1153 = vmatprep.subr.mxu0 0.0
    %1154 = vmatpush1.msra.mxu0 0.0
    %1155 = vmatprep.subr.mxu0 0.0
    %1156 = vmatpush1.msra.mxu0 0.0
    %1157 = vmatprep.subr.mxu0 0.0
    %1158 = vmatpush1.msra.mxu0 0.0
    %1159 = vmatprep.subr.mxu0 0.0
    %1160 = vmatpush1.msra.mxu0 0.0
    %1161 = vmatprep.subr.mxu0 0.0
    %1162 = vmatpush1.msra.mxu0 0.0
    %1163 = vmatprep.subr.mxu0 0.0
    %1164 = vmatpush1.msra.mxu0 0.0
    %1165 = vmatprep.subr.mxu0 0.0
    %1166 = vmatpush1.msra.mxu0 0.0
    %1167 = vmatprep.subr.mxu0 0.0
    %1168 = vmatpush1.msra.mxu0 0.0
    %1169 = vmatprep.subr.mxu0 0.0
    %1170 = vmatpush1.msra.mxu0 0.0
    %1171 = vmatprep.subr.mxu0 0.0
    %1172 = vmatpush1.msra.mxu0 0.0
    %1173 = vmatprep.subr.mxu0 0.0
    %1174 = vmatpush1.msra.mxu0 0.0
    %1175 = vmatprep.subr.mxu0 0.0
    %1176 = vmatpush1.msra.mxu0 0.0
    %1177 = vmatprep.subr.mxu0 0.0
    %1178 = vmatpush1.msra.mxu0 0.0
    %1179 = vmatprep.subr.mxu0 0.0
    %1180 = vmatpush1.msra.mxu0 0.0
    %1181 = vmatprep.mubr.f32.mxu0 0.0
    %1182 = vmatmul.mubr.f32.gmra.mrb[0].mxu0 %v1115
    %v1183 = vpop.f32.mrb[0].mxu0
    %v1184 = vadd.f32 0.0, %v1183
    %v1185 = vpop.f32.mrb[0].mxu0
    %1186 = vdwg.mxu0
    %v1188 = vrot.slane %v1184, 2
    %v1189 = vrot.slane %v1184, 3
    %v1192 = vadd.f32 %v241, %v1188
    %v1193 = vadd.f32 %v246, %v1189
    %v1194 = vxor.u32 %v1192, 2147483648
    %v1195 = vxor.u32 %v1193, 2147483648
    %v1196 = vmul.f32 %v1194, 1.442695
    %v1197 = vpow.pop %v1196
    %v1198 = vmul.f32 %v1195, 1.442695
    %v1199 = vpow.pop %v1198
    %v1200 = vadd.f32 %v1197, 1.0
    %v1201 = vadd.f32 %v1199, 1.0
    %v1202 = vrcp.pop %v1200
    %v1203 = vmul.f32 1.0, %v1202
    %v1204 = vrcp.pop %v1201
    %v1205 = vmul.f32 1.0, %v1204
    %v1206 = vtanh.pop %v1192
    %v1207 = vtanh.pop %v1193
    %v1210 = vrot.slane %v1090, 7
    %v1211 = vrot.slane %v1091, 7
    %v1214 = vmul.f32 %v1203, %v1210
    %v1215 = vmul.f32 %v1205, %v1211
    %1218 = vrot.lane.b32.xlu0 %v1206, 64
    %v1219 = vpop.permute.xlu0 %1218
    %1220 = vrot.lane.b32.xlu0 %v1207, 64
    %v1221 = vpop.permute.xlu0 %1220
    %v1224 = vmul.f32 %v1203, %v1219
    %v1225 = vmul.f32 %v1205, %v1221
    %1228 = vrot.lane.b32.xlu0 %v1224, 32
    %v1229 = vpop.permute.xlu0 %1228
    %1230 = vrot.lane.b32.xlu0 %v1225, 32
    %v1231 = vpop.permute.xlu0 %1230
    %v1234 = vadd.f32 %v1214, %v1229
    %v1235 = vadd.f32 %v1215, %v1231
    %v1236 = vtanh.pop %v1234
    %v1237 = vtanh.pop %v1235
    %1240 = vrot.lane.b32.xlu0 %v1236, 64
    %v1241 = vpop.permute.xlu0 %1240
    %1242 = vrot.lane.b32.xlu0 %v1237, 64
    %v1243 = vpop.permute.xlu0 %1242
    %v1246 = vmul.f32 %v1203, %v1241
    %v1247 = vmul.f32 %v1205, %v1243
    %v1250 = vrot.slane %v1246, 6
    %v1251 = vrot.slane %v1247, 5
    %v1252 = vsel %vm390, %v1251, %v1250
    %1253 = vrot.lane.b32.xlu0 %v1252, 32
    %v1254 = vpop.permute.xlu0 %1253
    %s1256 = scalar_lea.vmem [#allocation2], 6
    %1257 = vst [vmem:[%s1256] ss:$8 sm:$0x3] %v1254
    %1258 = vst [vmem:[%s1256] ss:$8 sm:$0x0] %v1254
    %v1259 = vsel %vm251, %v1254, 0
    %1261 = vmatprep.subr.mxu0 0.0
    %1262 = vmatpush1.msra.mxu0 %v69
    %1263 = vmatprep.subr.mxu0 0.0
    %1264 = vmatpush1.msra.mxu0 %v70
    %1265 = vmatprep.subr.mxu0 0.0
    %1266 = vmatpush1.msra.mxu0 %v71
    %1267 = vmatprep.subr.mxu0 0.0
    %1268 = vmatpush1.msra.mxu0 %v72
    %1269 = vmatprep.subr.mxu0 0.0
    %1270 = vmatpush1.msra.mxu0 0.0
    %1271 = vmatprep.subr.mxu0 0.0
    %1272 = vmatpush1.msra.mxu0 0.0
    %1273 = vmatprep.subr.mxu0 0.0
    %1274 = vmatpush1.msra.mxu0 0.0
    %1275 = vmatprep.subr.mxu0 0.0
    %1276 = vmatpush1.msra.mxu0 0.0
    %1277 = vmatprep.subr.mxu0 0.0
    %1278 = vmatpush1.msra.mxu0 0.0
    %1279 = vmatprep.subr.mxu0 0.0
    %1280 = vmatpush1.msra.mxu0 0.0
    %1281 = vmatprep.subr.mxu0 0.0
    %1282 = vmatpush1.msra.mxu0 0.0
    %1283 = vmatprep.subr.mxu0 0.0
    %1284 = vmatpush1.msra.mxu0 0.0
    %1285 = vmatprep.subr.mxu0 0.0
    %1286 = vmatpush1.msra.mxu0 0.0
    %1287 = vmatprep.subr.mxu0 0.0
    %1288 = vmatpush1.msra.mxu0 0.0
    %1289 = vmatprep.subr.mxu0 0.0
    %1290 = vmatpush1.msra.mxu0 0.0
    %1291 = vmatprep.subr.mxu0 0.0
    %1292 = vmatpush1.msra.mxu0 0.0
    %1293 = vmatprep.subr.mxu0 0.0
    %1294 = vmatpush1.msra.mxu0 0.0
    %1295 = vmatprep.subr.mxu0 0.0
    %1296 = vmatpush1.msra.mxu0 0.0
    %1297 = vmatprep.subr.mxu0 0.0
    %1298 = vmatpush1.msra.mxu0 0.0
    %1299 = vmatprep.subr.mxu0 0.0
    %1300 = vmatpush1.msra.mxu0 0.0
    %1301 = vmatprep.subr.mxu0 0.0
    %1302 = vmatpush1.msra.mxu0 0.0
    %1303 = vmatprep.subr.mxu0 0.0
    %1304 = vmatpush1.msra.mxu0 0.0
    %1305 = vmatprep.subr.mxu0 0.0
    %1306 = vmatpush1.msra.mxu0 0.0
    %1307 = vmatprep.subr.mxu0 0.0
    %1308 = vmatpush1.msra.mxu0 0.0
    %1309 = vmatprep.subr.mxu0 0.0
    %1310 = vmatpush1.msra.mxu0 0.0
    %1311 = vmatprep.subr.mxu0 0.0
    %1312 = vmatpush1.msra.mxu0 0.0
    %1313 = vmatprep.subr.mxu0 0.0
    %1314 = vmatpush1.msra.mxu0 0.0
    %1315 = vmatprep.subr.mxu0 0.0
    %1316 = vmatpush1.msra.mxu0 0.0
    %1317 = vmatprep.subr.mxu0 0.0
    %1318 = vmatpush1.msra.mxu0 0.0
    %1319 = vmatprep.subr.mxu0 0.0
    %1320 = vmatpush1.msra.mxu0 0.0
    %1321 = vmatprep.subr.mxu0 0.0
    %1322 = vmatpush1.msra.mxu0 0.0
    %1323 = vmatprep.subr.mxu0 0.0
    %1324 = vmatpush1.msra.mxu0 0.0
    %1325 = vmatprep.mubr.f32.mxu0 0.0
    %1326 = vmatmul.mubr.f32.gmra.mrb[0].mxu0 %v1259
    %v1327 = vpop.f32.mrb[0].mxu0
    %v1328 = vadd.f32 0.0, %v1327
    %v1329 = vpop.f32.mrb[0].mxu0
    %1330 = vdwg.mxu0
    %v1332 = vrot.slane %v1328, 1
    %v1333 = vrot.slane %v1328, 2
    %v1336 = vadd.f32 %v241, %v1332
    %v1337 = vadd.f32 %v246, %v1333
    %v1338 = vxor.u32 %v1336, 2147483648
    %v1339 = vxor.u32 %v1337, 2147483648
    %v1340 = vmul.f32 %v1338, 1.442695
    %v1341 = vpow.pop %v1340
    %v1342 = vmul.f32 %v1339, 1.442695
    %v1343 = vpow.pop %v1342
    %v1344 = vadd.f32 %v1341, 1.0
    %v1345 = vadd.f32 %v1343, 1.0
    %v1346 = vrcp.pop %v1344
    %v1347 = vmul.f32 1.0, %v1346
    %v1348 = vrcp.pop %v1345
    %v1349 = vmul.f32 1.0, %v1348
    %v1350 = vtanh.pop %v1336
    %v1351 = vtanh.pop %v1337
    %v1354 = vrot.slane %v1234, 7
    %v1355 = vrot.slane %v1235, 7
    %v1358 = vmul.f32 %v1347, %v1354
    %v1359 = vmul.f32 %v1349, %v1355
    %1362 = vrot.lane.b32.xlu0 %v1350, 64
    %v1363 = vpop.permute.xlu0 %1362
    %1364 = vrot.lane.b32.xlu0 %v1351, 64
    %v1365 = vpop.permute.xlu0 %1364
    %v1368 = vmul.f32 %v1347, %v1363
    %v1369 = vmul.f32 %v1349, %v1365
    %1372 = vrot.lane.b32.xlu0 %v1368, 32
    %v1373 = vpop.permute.xlu0 %1372
    %1374 = vrot.lane.b32.xlu0 %v1369, 32
    %v1375 = vpop.permute.xlu0 %1374
    %v1378 = vadd.f32 %v1358, %v1373
    %v1379 = vadd.f32 %v1359, %v1375
    %v1380 = vtanh.pop %v1378
    %v1381 = vtanh.pop %v1379
    %1384 = vrot.lane.b32.xlu0 %v1380, 64
    %v1385 = vpop.permute.xlu0 %1384
    %1386 = vrot.lane.b32.xlu0 %v1381, 64
    %v1387 = vpop.permute.xlu0 %1386
    %v1390 = vmul.f32 %v1347, %v1385
    %v1391 = vmul.f32 %v1349, %v1387
    %v1394 = vrot.slane %v1390, 7
    %v1395 = vrot.slane %v1391, 6
    %v1396 = vsel %vm390, %v1395, %v1394
    %1397 = vrot.lane.b32.xlu0 %v1396, 32
    %v1398 = vpop.permute.xlu0 %1397
    %s1400 = scalar_lea.vmem [#allocation2], 7
    %1401 = vst [vmem:[%s1400] ss:$8 sm:$0x3] %v1398
    %1402 = vst [vmem:[%s1400] ss:$8 sm:$0x0] %v1398
    %v1403 = vld [vmem:[#allocation2] sm:$0xff]
    %v1404 = vld [vmem:[#allocation2 + $0x8] sm:$0xff]
    %v1405 = vlaneseq
    %v1406 = vshrl.u32 %v1405, 7
    %v1407 = vsub.s32 0, %v1406
    %v1408 = vrot.slane %v79, %v1407
    %v1410 = vsel %vm251, %v1403, 0
    %v1413 = vsel %vm251, %v1404, 0
    %1415 = vmatprep.subr.mxu0 0.0
    %1416 = vmatpush1.msra.mxu0 %v73
    %1417 = vmatprep.subr.mxu0 0.0
    %1418 = vmatpush1.msra.mxu0 %v74
    %1419 = vmatprep.subr.mxu0 0.0
    %1420 = vmatpush1.msra.mxu0 %v75
    %1421 = vmatprep.subr.mxu0 0.0
    %1422 = vmatpush1.msra.mxu0 %v76
    %1423 = vmatprep.subr.mxu0 0.0
    %1424 = vmatpush1.msra.mxu0 0.0
    %1425 = vmatprep.subr.mxu0 0.0
    %1426 = vmatpush1.msra.mxu0 0.0
    %1427 = vmatprep.subr.mxu0 0.0
    %1428 = vmatpush1.msra.mxu0 0.0
    %1429 = vmatprep.subr.mxu0 0.0
    %1430 = vmatpush1.msra.mxu0 0.0
    %1431 = vmatprep.subr.mxu0 0.0
    %1432 = vmatpush1.msra.mxu0 0.0
    %1433 = vmatprep.subr.mxu0 0.0
    %1434 = vmatpush1.msra.mxu0 0.0
    %1435 = vmatprep.subr.mxu0 0.0
    %1436 = vmatpush1.msra.mxu0 0.0
    %1437 = vmatprep.subr.mxu0 0.0
    %1438 = vmatpush1.msra.mxu0 0.0
    %1439 = vmatprep.subr.mxu0 0.0
    %1440 = vmatpush1.msra.mxu0 0.0
    %1441 = vmatprep.subr.mxu0 0.0
    %1442 = vmatpush1.msra.mxu0 0.0
    %1443 = vmatprep.subr.mxu0 0.0
    %1444 = vmatpush1.msra.mxu0 0.0
    %1445 = vmatprep.subr.mxu0 0.0
    %1446 = vmatpush1.msra.mxu0 0.0
    %1447 = vmatprep.subr.mxu0 0.0
    %1448 = vmatpush1.msra.mxu0 0.0
    %1449 = vmatprep.subr.mxu0 0.0
    %1450 = vmatpush1.msra.mxu0 0.0
    %1451 = vmatprep.subr.mxu0 0.0
    %1452 = vmatpush1.msra.mxu0 0.0
    %1453 = vmatprep.subr.mxu0 0.0
    %1454 = vmatpush1.msra.mxu0 0.0
    %1455 = vmatprep.subr.mxu0 0.0
    %1456 = vmatpush1.msra.mxu0 0.0
    %1457 = vmatprep.subr.mxu0 0.0
    %1458 = vmatpush1.msra.mxu0 0.0
    %1459 = vmatprep.subr.mxu0 0.0
    %1460 = vmatpush1.msra.mxu0 0.0
    %1461 = vmatprep.subr.mxu0 0.0
    %1462 = vmatpush1.msra.mxu0 0.0
    %1463 = vmatprep.subr.mxu0 0.0
    %1464 = vmatpush1.msra.mxu0 0.0
    %1465 = vmatprep.subr.mxu0 0.0
    %1466 = vmatpush1.msra.mxu0 0.0
    %1467 = vmatprep.subr.mxu0 0.0
    %1468 = vmatpush1.msra.mxu0 0.0
    %1469 = vmatprep.subr.mxu0 0.0
    %1470 = vmatpush1.msra.mxu0 0.0
    %1471 = vmatprep.subr.mxu0 0.0
    %1472 = vmatpush1.msra.mxu0 0.0
    %1473 = vmatprep.subr.mxu0 0.0
    %1474 = vmatpush1.msra.mxu0 0.0
    %1475 = vmatprep.subr.mxu0 0.0
    %1476 = vmatpush1.msra.mxu0 0.0
    %1477 = vmatprep.subr.mxu0 0.0
    %1478 = vmatpush1.msra.mxu0 0.0
    %1479 = vmatprep.mubr.f32.mxu0 0.0
    %1480 = vmatmul.mubr.f32.gmra.mrb[0].mxu0 %v1410
    %v1481 = vpop.f32.mrb[0].mxu0
    %v1482 = vadd.f32 %v1408, %v1481
    %v1483 = vpop.f32.mrb[0].mxu0
    %1484 = vmatprep.mubr.f32.mxu0 0.0
    %1485 = vmatmul.mubr.f32.gmra.mrb[0].mxu0 %v1413
    %v1486 = vpop.f32.mrb[0].mxu0
    %v1487 = vadd.f32 %v1408, %v1486
    %v1488 = vpop.f32.mrb[0].mxu0
    %1489 = vdwg.mxu0
    %1490 = vst [vmem:[%s4] sm:$0xff] %v1482
    %1491 = vst [vmem:[%s4 + $0x8] sm:$0xff] %v1487
    %1492 = vst [vmem:[%s4 + $0x10] sm:$0xf] 0.0
    %v1493 = vrot.slane %v1391, 7
    %1494 = vrot.lane.b32.xlu0 %v1390, 32
    %v1495 = vpop.permute.xlu0 %1494
    %1496 = vrot.lane.b32.xlu0 %v1493, 32
    %v1497 = vpop.permute.xlu0 %1496
    %vm1500 = vcmask 261127
    %1501 = vst.msk [vmem:[%s4 + $0x9] sm:$0x80] %vm1500, %v1495
    %vm1502 = vcmask 253952
    %1503 = vst.msk [vmem:[%s4 + $0x11] sm:$0x1] %vm1502, %v1497
    %v1506 = vrot.slane %v1379, 7
    %1507 = vrot.lane.b32.xlu0 %v1378, 96
    %v1508 = vpop.permute.xlu0 %1507
    %1509 = vrot.lane.b32.xlu0 %v1506, 96
    %v1510 = vpop.permute.xlu0 %1509
    %1513 = vst.msk [vmem:[%s4 + $0xb] sm:$0x80] %vm1500, %v1508
    %1514 = vst.msk [vmem:[%s4 + $0x13] sm:$0x1] %vm1502, %v1510
    // Predicated region
    $region26: #{rllib_policy_forward.1} parent=1 // pred_check
      _
    $region27: #{rllib_policy_forward.1} parent=1 // pred_check_branch
      %1516 = sbr.rel (0) target = $region29
    $region28: #{rllib_policy_forward.1} parent=1 // pred_region
      _
    $region29: #{rllib_policy_forward.1} parent=1 // pred_fallthru
      _
    // Predicated region
    $region30: #{rllib_policy_forward.1} parent=1 // pred_check
      _
    $region31: #{rllib_policy_forward.1} parent=1 // pred_check_branch
      %1518 = sbr.rel (0) target = $region33
    $region32: #{rllib_policy_forward.1} parent=1 // pred_region
      _
    $region33: #{rllib_policy_forward.1} parent=1 // pred_fallthru
      _
    %1519 = vsyncpa [#allocation4], 1
    %1520 = vsyncpa [#allocation6], 1

</llo_original>
